<compile_context>
chip_gen: v5e
topology: v5e:2x2
jax: 0.10.0
libtpu: 0.0.40
codegen_flags: <defaults>
</compile_context>

<pallas_src>
import functools

import jax
import jax.numpy as jnp
import numpy as np
from jax import lax
from jax.experimental import pallas as pl
from jax.experimental.pallas import tpu as pltpu


# --------------------------------------------------------------------------
# Fused kernel: one (batch-tile, key-tile) grid step.
# --------------------------------------------------------------------------
def _mha_flash_kernel(q_ref, k_ref, v_ref, wq_ref, wk_ref, wv_ref, wo_ref,
                      b_ref, o_ref, qp_ref, m_ref, l_ref, acc_ref,
                      *, heads, head_dim):
    """Blocks:
      q_ref  (Bt, Lq, E) f32      wq/wk/wv_ref (E, E) bf16 block-diagonal
      k_ref  (Bt, Tk, E) f32      wo_ref       (E, E) bf16
      v_ref  (Bt, Tk, E) f32      b_ref        (1, E) f32
      o_ref  (Bt, Lq, E) f32
    Scratch (persists across the key-tile axis):
      qp_ref  (Bt, Lq, E)    bf16  projected (and pre-scaled) queries
      m_ref   (H, Bt, Lq, 1) f32   running row max
      l_ref   (H, Bt, Lq, 1) f32   running softmax denominator
      acc_ref (Bt, Lq, E)    f32   unnormalized per-head context (lane slices)
    """
    kt = pl.program_id(1)
    nk = pl.num_programs(1)
    f32 = jnp.float32
    bf16 = jnp.bfloat16

    # ---- first key tile of this batch tile: project Q once, reset state.
    @pl.when(kt == 0)
    def _():
        q = q_ref[...].astype(bf16)                              # (Bt, Lq, E)
        qp_ref[...] = jnp.einsum("bqe,ef->bqf", q, wq_ref[...],
                                 preferred_element_type=f32).astype(bf16)
        m_ref[...] = jnp.full_like(m_ref, -jnp.inf)
        l_ref[...] = jnp.zeros_like(l_ref)
        acc_ref[...] = jnp.zeros_like(acc_ref)

    # ---- project the current K/V tile: one E-wide block-diagonal matmul each.
    k = k_ref[...].astype(bf16)                                  # (Bt, Tk, E)
    v = v_ref[...].astype(bf16)
    kh_all = jnp.einsum("bke,ef->bkf", k, wk_ref[...],
                        preferred_element_type=f32).astype(bf16)
    vh_all = jnp.einsum("bke,ef->bkf", v, wv_ref[...],
                        preferred_element_type=f32).astype(bf16)
    qh_all = qp_ref[...]                                         # (Bt, Lq, E)

    # ---- per-head online softmax (static unroll; heads is small here).
    for h in range(heads):
        s = h * head_dim
        e = s + head_dim
        qh = qh_all[:, :, s:e]                                   # (Bt, Lq, D)
        kh = kh_all[:, :, s:e]                                   # (Bt, Tk, D)
        vh = vh_all[:, :, s:e]                                   # (Bt, Tk, D)

        # QK^T contracts the last dims directly -> no transpose of K.
        # (1/sqrt(E) scale is already folded into the query weights.)
        energy = jnp.einsum("bqd,bkd->bqk", qh, kh,
                            preferred_element_type=f32)          # (Bt, Lq, Tk)

        m_prev = m_ref[h]                                        # (Bt, Lq, 1)
        m_new = jnp.maximum(m_prev, jnp.max(energy, axis=-1, keepdims=True))
        alpha = jnp.exp(m_prev - m_new)                          # f32, v5e-safe
        p = jnp.exp(energy - m_new)                              # (Bt, Lq, Tk)
        l_ref[h] = alpha * l_ref[h] + jnp.sum(p, axis=-1, keepdims=True)
        pv = jnp.einsum("bqk,bkd->bqd", p.astype(bf16), vh,
                        preferred_element_type=f32)              # (Bt, Lq, D)
        acc_ref[:, :, s:e] = alpha * acc_ref[:, :, s:e] + pv
        m_ref[h] = m_new

    # ---- last key tile: normalize each head, then fused fc_out + bias.
    @pl.when(kt == nk - 1)
    def _():
        for h in range(heads):
            s = h * head_dim
            e = s + head_dim
            inv_l = pl.reciprocal(l_ref[h], approx=True)         # (Bt, Lq, 1)
            acc_ref[:, :, s:e] = acc_ref[:, :, s:e] * inv_l
        ctx = acc_ref[...].astype(bf16)                          # (Bt, Lq, E)
        out = jnp.einsum("bqe,ef->bqf", ctx, wo_ref[...],
                         preferred_element_type=f32)             # (Bt, Lq, E)
        o_ref[...] = (out + b_ref[...]).astype(o_ref.dtype)


# --------------------------------------------------------------------------
# One-time weight preparation (hoisted out of the per-call wrapper).
# --------------------------------------------------------------------------
def prepare_mha_params(params, *, heads):
    """Transpose weights, fold 1/sqrt(E) into Wq, build block-diagonal
    per-head projection matrices (kron), and cast MXU operands to bf16."""
    E = params["w_out"].shape[0]
    D = E // heads
    assert D * heads == E
    scale = 1.0 / float(E) ** 0.5
    eye = jnp.eye(heads, dtype=jnp.float32)
    wq_bd = (jnp.kron(eye, params["w_q"].astype(jnp.float32).T)
             * scale).astype(jnp.bfloat16)                       # (E, E)
    wk_bd = jnp.kron(eye, params["w_k"].astype(jnp.float32).T).astype(jnp.bfloat16)
    wv_bd = jnp.kron(eye, params["w_v"].astype(jnp.float32).T).astype(jnp.bfloat16)
    wo_t = params["w_out"].astype(jnp.float32).T.astype(jnp.bfloat16)  # (E_in, E_out)
    b = params["b_out"].reshape(1, E).astype(jnp.float32)
    return {"wq_bd": wq_bd, "wk_bd": wk_bd, "wv_bd": wv_bd, "wo_t": wo_t, "b": b}


def _largest_divisor(n, cap, align=1):
    """Largest divisor of n that is <= cap and a multiple of `align`;
    falls back to n itself (full extent, always BlockSpec-legal)."""
    cap = min(cap, n)
    for d in range(cap, 0, -1):
        if n % d == 0 and d % align == 0:
            return d
    return n


def _vmem_limit_bytes():
    cap = 64 * 1024 * 1024
    try:
        cap = int(getattr(pltpu.get_tpu_info(), "vmem_capacity_bytes", cap))
    except Exception:
        pass
    # ~3/4 of physical VMEM, never above ~100 MiB: ~96 MiB on 128-MiB
    # v5e/v6e, ~48 MiB on 64-MiB-per-TC v7x.
    return int(min(cap * 3 // 4, 100 * 1024 * 1024))


# --------------------------------------------------------------------------
# Module wrapper: matches MultiHeadAttention.forward(values, keys, query).
# --------------------------------------------------------------------------
def multi_head_attention(values, keys, query, prepared, *, heads):
    N, Lq, E = query.shape
    Lk = keys.shape[1]
    Lv = values.shape[1]
    assert Lk == Lv, "key_len must equal value_len (as the torch einsum requires)"
    D = E // heads
    assert D * heads == E

    # Key/value tile: flash-tile long sequences; keep (8,128)-aligned blocks.
    Tk = _largest_divisor(Lk, 512, align=8) if Lk > 512 else Lk
    # Batch tile: coarsen until the per-step f32 working set is a few MiB,
    # but keep >= 2 parallel batch steps when N allows (v7x has 2 TensorCores).
    step_bytes = ((Lq + 2 * Tk) * E + Lq * E) * 4
    Bt = _largest_divisor(N, max(1, (4 * 1024 * 1024) // max(step_bytes, 1)))
    if N >= 2 and N // Bt < 2:
        Bt = _largest_divisor(N, N // 2)

    grid = (N // Bt, Lk // Tk)
    kernel = functools.partial(_mha_flash_kernel, heads=heads, head_dim=D)

    return pl.pallas_call(
        kernel,
        out_shape=jax.ShapeDtypeStruct((N, Lq, E), jnp.float32),
        grid_spec=pltpu.PrefetchScalarGridSpec(
            num_scalar_prefetch=0,
            grid=grid,
            in_specs=[
                pl.BlockSpec((Bt, Lq, E), lambda b, kt: (b, 0, 0)),   # query
                pl.BlockSpec((Bt, Tk, E), lambda b, kt: (b, kt, 0)),  # keys
                pl.BlockSpec((Bt, Tk, E), lambda b, kt: (b, kt, 0)),  # values
                pl.BlockSpec((E, E), lambda b, kt: (0, 0)),           # Wq blockdiag
                pl.BlockSpec((E, E), lambda b, kt: (0, 0)),           # Wk blockdiag
                pl.BlockSpec((E, E), lambda b, kt: (0, 0)),           # Wv blockdiag
                pl.BlockSpec((E, E), lambda b, kt: (0, 0)),           # W_out^T
                pl.BlockSpec((1, E), lambda b, kt: (0, 0)),           # bias
            ],
            out_specs=pl.BlockSpec((Bt, Lq, E), lambda b, kt: (b, 0, 0)),
            scratch_shapes=[
                pltpu.VMEM((Bt, Lq, E), jnp.bfloat16),        # projected Q
                pltpu.VMEM((heads, Bt, Lq, 1), jnp.float32),  # running max
                pltpu.VMEM((heads, Bt, Lq, 1), jnp.float32),  # running denom
                pltpu.VMEM((Bt, Lq, E), jnp.float32),         # unnormalized ctx
            ],
        ),
        compiler_params=pltpu.CompilerParams(
            dimension_semantics=("parallel", "arbitrary"),
            vmem_limit_bytes=_vmem_limit_bytes(),
        ),
    )(query, keys, values,
      prepared["wq_bd"], prepared["wk_bd"], prepared["wv_bd"],
      prepared["wo_t"], prepared["b"])


# --------------------------------------------------------------------------
# Pure-JAX reference (mirrors the PyTorch forward exactly) for verification.
# --------------------------------------------------------------------------
def reference_mha(values, keys, query, params, *, heads):
    N, Lq, E = query.shape
    Lk, Lv = keys.shape[1], values.shape[1]
    D = E // heads
    v = values.reshape(N, Lv, heads, D) @ params["w_v"].T
    k = keys.reshape(N, Lk, heads, D) @ params["w_k"].T
    q = query.reshape(N, Lq, heads, D) @ params["w_q"].T
    energy = jnp.einsum("nqhd,nkhd->nhqk", q, k)
    attention = jax.nn.softmax(energy / (E ** 0.5), axis=3)
    out = jnp.einsum("nhql,nlhd->nqhd", attention, v).reshape(N, Lq, E)
    return out @ params["w_out"].T + params["b_out"]


if __name__ == "__main__":
    # Small, module-consistent shapes.
    N, SEQ, EMBED, HEADS = 2, 8, 32, 4
    D = EMBED // HEADS

    key = jax.random.PRNGKey(0)
    k_v, k_k, k_q, k_wv, k_wk, k_wq, k_wo, k_bo = jax.random.split(key, 8)

    values = jax.random.normal(k_v, (N, SEQ, EMBED), dtype=jnp.float32)
    keys_in = jax.random.normal(k_k, (N, SEQ, EMBED), dtype=jnp.float32)
    query = jax.random.normal(k_q, (N, SEQ, EMBED), dtype=jnp.float32)

    # Deterministic synthetic parameters (PyTorch Linear stores weight as (out, in)).
    params = {
        "w_v": 0.1 * jax.random.normal(k_wv, (D, D), dtype=jnp.float32),
        "w_k": 0.1 * jax.random.normal(k_wk, (D, D), dtype=jnp.float32),
        "w_q": 0.1 * jax.random.normal(k_wq, (D, D), dtype=jnp.float32),
        "w_out": 0.1 * jax.random.normal(k_wo, (EMBED, EMBED), dtype=jnp.float32),
        "b_out": 0.1 * jax.random.normal(k_bo, (EMBED,), dtype=jnp.float32),
    }

    prepared = prepare_mha_params(params, heads=HEADS)   # computed once, reused
    out = multi_head_attention(values, keys_in, query, prepared, heads=HEADS)
    out = jax.block_until_ready(out)

    ref = reference_mha(values, keys_in, query, params, heads=HEADS)
    # bf16 matmul operands + approx softmax reciprocal -> relaxed tolerance.
    np.testing.assert_allclose(np.asarray(out), np.asarray(ref), rtol=2e-2, atol=2e-2)

    print("KERNEL_OK")
</pallas_src>

<mosaic_0001>
module attributes {stable_mosaic.version = 11 : i64} {
  func.func @_mha_flash_kernel(%arg0: i32, %arg1: i32, %arg2: memref<1x8x32xf32, #tpu.memory_space<vmem>>, %arg3: memref<1x8x32xf32, #tpu.memory_space<vmem>>, %arg4: memref<1x8x32xf32, #tpu.memory_space<vmem>>, %arg5: memref<32x32xbf16, #tpu.memory_space<vmem>>, %arg6: memref<32x32xbf16, #tpu.memory_space<vmem>>, %arg7: memref<32x32xbf16, #tpu.memory_space<vmem>>, %arg8: memref<32x32xbf16, #tpu.memory_space<vmem>>, %arg9: memref<1x32xf32, #tpu.memory_space<vmem>>, %arg10: memref<1x8x32xf32, #tpu.memory_space<vmem>>, %arg11: memref<1x8x32xbf16, #tpu.memory_space<vmem>>, %arg12: memref<4x1x8x1xf32, #tpu.memory_space<vmem>>, %arg13: memref<4x1x8x1xf32, #tpu.memory_space<vmem>>, %arg14: memref<1x8x32xf32, #tpu.memory_space<vmem>>) attributes {dimension_semantics = [#tpu.dimension_semantics<parallel>, #tpu.dimension_semantics<arbitrary>], iteration_bounds = array<i64: 2, 1>, scalar_prefetch = 0 : i64, scratch_operands = 4 : i64, tpu.core_type = #tpu.core_type<tc>, window_params = [{transform_indices = @transform_0, window_bounds = array<i64: 1, 8, 32>}, {transform_indices = @transform_1, window_bounds = array<i64: 1, 8, 32>}, {transform_indices = @transform_2, window_bounds = array<i64: 1, 8, 32>}, {pipeline_mode = #tpu.pipeline_mode<synchronous>, transform_indices = @transform_3, window_bounds = array<i64: 32, 32>}, {pipeline_mode = #tpu.pipeline_mode<synchronous>, transform_indices = @transform_4, window_bounds = array<i64: 32, 32>}, {pipeline_mode = #tpu.pipeline_mode<synchronous>, transform_indices = @transform_5, window_bounds = array<i64: 32, 32>}, {pipeline_mode = #tpu.pipeline_mode<synchronous>, transform_indices = @transform_6, window_bounds = array<i64: 32, 32>}, {pipeline_mode = #tpu.pipeline_mode<synchronous>, transform_indices = @transform_7, window_bounds = array<i64: 1, 32>}, {transform_indices = @transform_8, window_bounds = array<i64: 1, 8, 32>}]} {
    %c0_i32 = arith.constant 0 : i32
    %0 = arith.cmpi eq, %arg1, %c0_i32 : i32
    %1 = arith.extui %0 : i1 to i32
    %c0_i32_0 = arith.constant 0 : i32
    %2 = arith.cmpi ne, %1, %c0_i32_0 : i32
    scf.if %2 {
      %c0_114 = arith.constant 0 : index
      %c0_115 = arith.constant 0 : index
      %c0_116 = arith.constant 0 : index
      %149 = vector.load %arg2[%c0_114, %c0_115, %c0_116] : memref<1x8x32xf32, #tpu.memory_space<vmem>>, vector<1x8x32xf32>
      %150 = arith.truncf %149 : vector<1x8x32xf32> to vector<1x8x32xbf16>
      %c0_117 = arith.constant 0 : index
      %c0_118 = arith.constant 0 : index
      %151 = vector.load %arg5[%c0_117, %c0_118] : memref<32x32xbf16, #tpu.memory_space<vmem>>, vector<32x32xbf16>
      "tpu.trace_start"() <{level = 10 : i32, message = "bqe,ef->bqf"}> : () -> ()
      %cst_119 = arith.constant dense<0.000000e+00> : vector<1x8x32xf32>
      %152 = tpu.matmul %150, %151, %cst_119 {dimension_numbers = #tpu.dot_dimension_numbers<[2], [0], [0, 1], [1], [0, 0, 0, 1, 1, 1], [], []>} : vector<1x8x32xbf16>, vector<32x32xbf16>, vector<1x8x32xf32> -> vector<1x8x32xf32>
      "tpu.trace_stop"() : () -> ()
      %153 = arith.truncf %152 : vector<1x8x32xf32> to vector<1x8x32xbf16>
      %c0_120 = arith.constant 0 : index
      %c0_121 = arith.constant 0 : index
      %c0_122 = arith.constant 0 : index
      %154 = vector.load %arg11[%c0_120, %c0_121, %c0_122] : memref<1x8x32xbf16, #tpu.memory_space<vmem>>, vector<1x8x32xbf16>
      tpu.vector_store %arg11[%c0_120, %c0_121, %c0_122], %153 {strides = array<i32>} : memref<1x8x32xbf16, #tpu.memory_space<vmem>>, vector<1x8x32xbf16>,
      %cst_123 = arith.constant 0xFF800000 : f32
      %155 = vector.broadcast %cst_123 : f32 to vector<4x1x8x1xf32>
      %c0_124 = arith.constant 0 : index
      %c0_125 = arith.constant 0 : index
      %c0_126 = arith.constant 0 : index
      %c0_127 = arith.constant 0 : index
      %156 = vector.load %arg12[%c0_124, %c0_125, %c0_126, %c0_127] : memref<4x1x8x1xf32, #tpu.memory_space<vmem>>, vector<4x1x8x1xf32>
      tpu.vector_store %arg12[%c0_124, %c0_125, %c0_126, %c0_127], %155 {strides = array<i32>} : memref<4x1x8x1xf32, #tpu.memory_space<vmem>>, vector<4x1x8x1xf32>,
      %cst_128 = arith.constant 0.000000e+00 : f32
      %157 = vector.broadcast %cst_128 : f32 to vector<4x1x8x1xf32>
      %c0_129 = arith.constant 0 : index
      %c0_130 = arith.constant 0 : index
      %c0_131 = arith.constant 0 : index
      %c0_132 = arith.constant 0 : index
      %158 = vector.load %arg13[%c0_129, %c0_130, %c0_131, %c0_132] : memref<4x1x8x1xf32, #tpu.memory_space<vmem>>, vector<4x1x8x1xf32>
      tpu.vector_store %arg13[%c0_129, %c0_130, %c0_131, %c0_132], %157 {strides = array<i32>} : memref<4x1x8x1xf32, #tpu.memory_space<vmem>>, vector<4x1x8x1xf32>,
      %cst_133 = arith.constant 0.000000e+00 : f32
      %159 = vector.broadcast %cst_133 : f32 to vector<1x8x32xf32>
      %c0_134 = arith.constant 0 : index
      %c0_135 = arith.constant 0 : index
      %c0_136 = arith.constant 0 : index
      %160 = vector.load %arg14[%c0_134, %c0_135, %c0_136] : memref<1x8x32xf32, #tpu.memory_space<vmem>>, vector<1x8x32xf32>
      tpu.vector_store %arg14[%c0_134, %c0_135, %c0_136], %159 {strides = array<i32>} : memref<1x8x32xf32, #tpu.memory_space<vmem>>, vector<1x8x32xf32>,
    } else {
    }
    %c0 = arith.constant 0 : index
    %c0_1 = arith.constant 0 : index
    %c0_2 = arith.constant 0 : index
    %3 = vector.load %arg3[%c0, %c0_1, %c0_2] : memref<1x8x32xf32, #tpu.memory_space<vmem>>, vector<1x8x32xf32>
    %4 = arith.truncf %3 : vector<1x8x32xf32> to vector<1x8x32xbf16>
    %c0_3 = arith.constant 0 : index
    %c0_4 = arith.constant 0 : index
    %c0_5 = arith.constant 0 : index
    %5 = vector.load %arg4[%c0_3, %c0_4, %c0_5] : memref<1x8x32xf32, #tpu.memory_space<vmem>>, vector<1x8x32xf32>
    %6 = arith.truncf %5 : vector<1x8x32xf32> to vector<1x8x32xbf16>
    %c0_6 = arith.constant 0 : index
    %c0_7 = arith.constant 0 : index
    %7 = vector.load %arg6[%c0_6, %c0_7] : memref<32x32xbf16, #tpu.memory_space<vmem>>, vector<32x32xbf16>
    "tpu.trace_start"() <{level = 10 : i32, message = "bke,ef->bkf"}> : () -> ()
    %cst = arith.constant dense<0.000000e+00> : vector<1x8x32xf32>
    %8 = tpu.matmul %4, %7, %cst {dimension_numbers = #tpu.dot_dimension_numbers<[2], [0], [0, 1], [1], [0, 0, 0, 1, 1, 1], [], []>} : vector<1x8x32xbf16>, vector<32x32xbf16>, vector<1x8x32xf32> -> vector<1x8x32xf32>
    "tpu.trace_stop"() : () -> ()
    %9 = arith.truncf %8 : vector<1x8x32xf32> to vector<1x8x32xbf16>
    %c0_8 = arith.constant 0 : index
    %c0_9 = arith.constant 0 : index
    %10 = vector.load %arg7[%c0_8, %c0_9] : memref<32x32xbf16, #tpu.memory_space<vmem>>, vector<32x32xbf16>
    "tpu.trace_start"() <{level = 10 : i32, message = "bke,ef->bkf"}> : () -> ()
    %cst_10 = arith.constant dense<0.000000e+00> : vector<1x8x32xf32>
    %11 = tpu.matmul %6, %10, %cst_10 {dimension_numbers = #tpu.dot_dimension_numbers<[2], [0], [0, 1], [1], [0, 0, 0, 1, 1, 1], [], []>} : vector<1x8x32xbf16>, vector<32x32xbf16>, vector<1x8x32xf32> -> vector<1x8x32xf32>
    "tpu.trace_stop"() : () -> ()
    %12 = arith.truncf %11 : vector<1x8x32xf32> to vector<1x8x32xbf16>
    %c0_11 = arith.constant 0 : index
    %c0_12 = arith.constant 0 : index
    %c0_13 = arith.constant 0 : index
    %13 = vector.load %arg11[%c0_11, %c0_12, %c0_13] : memref<1x8x32xbf16, #tpu.memory_space<vmem>>, vector<1x8x32xbf16>
    %14 = vector.extract_strided_slice %13 {offsets = [0, 0, 0], sizes = [1, 8, 8], strides = [1, 1, 1]} : vector<1x8x32xbf16> to vector<1x8x8xbf16>
    %15 = vector.extract_strided_slice %9 {offsets = [0, 0, 0], sizes = [1, 8, 8], strides = [1, 1, 1]} : vector<1x8x32xbf16> to vector<1x8x8xbf16>
    %16 = vector.extract_strided_slice %12 {offsets = [0, 0, 0], sizes = [1, 8, 8], strides = [1, 1, 1]} : vector<1x8x32xbf16> to vector<1x8x8xbf16>
    "tpu.trace_start"() <{level = 10 : i32, message = "bqd,bkd->bqk"}> : () -> ()
    %cst_14 = arith.constant dense<0.000000e+00> : vector<1x8x8xf32>
    %17 = tpu.matmul %14, %15, %cst_14 {dimension_numbers = #tpu.dot_dimension_numbers<[2], [2], [1], [1], [0, 0, 0, 1, 1, 1], [0], [0]>} : vector<1x8x8xbf16>, vector<1x8x8xbf16>, vector<1x8x8xf32> -> vector<1x8x8xf32>
    "tpu.trace_stop"() : () -> ()
    %c0_15 = arith.constant 0 : index
    %c0_16 = arith.constant 0 : index
    %c0_17 = arith.constant 0 : index
    %c0_18 = arith.constant 0 : index
    %18 = vector.load %arg12[%c0_15, %c0_16, %c0_17, %c0_18] : memref<4x1x8x1xf32, #tpu.memory_space<vmem>>, vector<1x1x8x1xf32>
    %19 = vector.shape_cast %18 : vector<1x1x8x1xf32> to vector<1x8x1xf32>
    %cst_19 = arith.constant dense<0xFF800000> : vector<1x8xf32>
    %20 = vector.multi_reduction <maximumf>, %17, %cst_19 [2] : vector<1x8x8xf32> to vector<1x8xf32>
    %21 = vector.shape_cast %20 : vector<1x8xf32> to vector<1x8x1xf32>
    %22 = arith.maximumf %19, %21 : vector<1x8x1xf32>
    %23 = arith.subf %19, %22 : vector<1x8x1xf32>
    %24 = math.exp %23 : vector<1x8x1xf32>
    %25 = vector.broadcast %22 : vector<1x8x1xf32> to vector<1x8x8xf32>
    %26 = arith.subf %17, %25 : vector<1x8x8xf32>
    %27 = math.exp %26 : vector<1x8x8xf32>
    %c0_20 = arith.constant 0 : index
    %c0_21 = arith.constant 0 : index
    %c0_22 = arith.constant 0 : index
    %c0_23 = arith.constant 0 : index
    %28 = vector.load %arg13[%c0_20, %c0_21, %c0_22, %c0_23] : memref<4x1x8x1xf32, #tpu.memory_space<vmem>>, vector<1x1x8x1xf32>
    %29 = vector.shape_cast %28 : vector<1x1x8x1xf32> to vector<1x8x1xf32>
    %30 = arith.mulf %24, %29 : vector<1x8x1xf32>
    %cst_24 = arith.constant dense<0.000000e+00> : vector<1x8xf32>
    %31 = vector.multi_reduction <add>, %27, %cst_24 [2] : vector<1x8x8xf32> to vector<1x8xf32>
    %32 = vector.shape_cast %31 : vector<1x8xf32> to vector<1x8x1xf32>
    %33 = arith.addf %30, %32 : vector<1x8x1xf32>
    %c0_25 = arith.constant 0 : index
    %c0_26 = arith.constant 0 : index
    %c0_27 = arith.constant 0 : index
    %c0_28 = arith.constant 0 : index
    %34 = vector.load %arg13[%c0_25, %c0_26, %c0_27, %c0_28] : memref<4x1x8x1xf32, #tpu.memory_space<vmem>>, vector<1x1x8x1xf32>
    %35 = vector.shape_cast %34 : vector<1x1x8x1xf32> to vector<1x8x1xf32>
    %36 = vector.shape_cast %33 : vector<1x8x1xf32> to vector<1x1x8x1xf32>
    tpu.vector_store %arg13[%c0_25, %c0_26, %c0_27, %c0_28], %36 {strides = array<i32>} : memref<4x1x8x1xf32, #tpu.memory_space<vmem>>, vector<1x1x8x1xf32>,
    %37 = arith.truncf %27 : vector<1x8x8xf32> to vector<1x8x8xbf16>
    "tpu.trace_start"() <{level = 10 : i32, message = "bqk,bkd->bqd"}> : () -> ()
    %cst_29 = arith.constant dense<0.000000e+00> : vector<1x8x8xf32>
    %38 = tpu.matmul %37, %16, %cst_29 {dimension_numbers = #tpu.dot_dimension_numbers<[2], [1], [1], [2], [0, 0, 0, 1, 1, 2], [0], [0]>} : vector<1x8x8xbf16>, vector<1x8x8xbf16>, vector<1x8x8xf32> -> vector<1x8x8xf32>
    "tpu.trace_stop"() : () -> ()
    %c0_30 = arith.constant 0 : index
    %c0_31 = arith.constant 0 : index
    %c0_32 = arith.constant 0 : index
    %39 = vector.load %arg14[%c0_30, %c0_31, %c0_32] : memref<1x8x32xf32, #tpu.memory_space<vmem>>, vector<1x8x8xf32>
    %40 = vector.broadcast %24 : vector<1x8x1xf32> to vector<1x8x8xf32>
    %41 = arith.mulf %40, %39 : vector<1x8x8xf32>
    %42 = arith.addf %41, %38 : vector<1x8x8xf32>
    %c0_33 = arith.constant 0 : index
    %c0_34 = arith.constant 0 : index
    %c0_35 = arith.constant 0 : index
    %43 = vector.load %arg14[%c0_33, %c0_34, %c0_35] : memref<1x8x32xf32, #tpu.memory_space<vmem>>, vector<1x8x8xf32>
    tpu.vector_store %arg14[%c0_33, %c0_34, %c0_35], %42 {strides = array<i32>} : memref<1x8x32xf32, #tpu.memory_space<vmem>>, vector<1x8x8xf32>,
    %c0_36 = arith.constant 0 : index
    %c0_37 = arith.constant 0 : index
    %c0_38 = arith.constant 0 : index
    %c0_39 = arith.constant 0 : index
    %44 = vector.load %arg12[%c0_36, %c0_37, %c0_38, %c0_39] : memref<4x1x8x1xf32, #tpu.memory_space<vmem>>, vector<1x1x8x1xf32>
    %45 = vector.shape_cast %44 : vector<1x1x8x1xf32> to vector<1x8x1xf32>
    %46 = vector.shape_cast %22 : vector<1x8x1xf32> to vector<1x1x8x1xf32>
    tpu.vector_store %arg12[%c0_36, %c0_37, %c0_38, %c0_39], %46 {strides = array<i32>} : memref<4x1x8x1xf32, #tpu.memory_space<vmem>>, vector<1x1x8x1xf32>,
    %47 = vector.extract_strided_slice %13 {offsets = [0, 0, 8], sizes = [1, 8, 8], strides = [1, 1, 1]} : vector<1x8x32xbf16> to vector<1x8x8xbf16>
    %48 = vector.extract_strided_slice %9 {offsets = [0, 0, 8], sizes = [1, 8, 8], strides = [1, 1, 1]} : vector<1x8x32xbf16> to vector<1x8x8xbf16>
    %49 = vector.extract_strided_slice %12 {offsets = [0, 0, 8], sizes = [1, 8, 8], strides = [1, 1, 1]} : vector<1x8x32xbf16> to vector<1x8x8xbf16>
    "tpu.trace_start"() <{level = 10 : i32, message = "bqd,bkd->bqk"}> : () -> ()
    %cst_40 = arith.constant dense<0.000000e+00> : vector<1x8x8xf32>
    %50 = tpu.matmul %47, %48, %cst_40 {dimension_numbers = #tpu.dot_dimension_numbers<[2], [2], [1], [1], [0, 0, 0, 1, 1, 1], [0], [0]>} : vector<1x8x8xbf16>, vector<1x8x8xbf16>, vector<1x8x8xf32> -> vector<1x8x8xf32>
    "tpu.trace_stop"() : () -> ()
    %c1 = arith.constant 1 : index
    %c0_41 = arith.constant 0 : index
    %c0_42 = arith.constant 0 : index
    %c0_43 = arith.constant 0 : index
    %51 = vector.load %arg12[%c1, %c0_41, %c0_42, %c0_43] : memref<4x1x8x1xf32, #tpu.memory_space<vmem>>, vector<1x1x8x1xf32>
    %52 = vector.shape_cast %51 : vector<1x1x8x1xf32> to vector<1x8x1xf32>
    %cst_44 = arith.constant dense<0xFF800000> : vector<1x8xf32>
    %53 = vector.multi_reduction <maximumf>, %50, %cst_44 [2] : vector<1x8x8xf32> to vector<1x8xf32>
    %54 = vector.shape_cast %53 : vector<1x8xf32> to vector<1x8x1xf32>
    %55 = arith.maximumf %52, %54 : vector<1x8x1xf32>
    %56 = arith.subf %52, %55 : vector<1x8x1xf32>
    %57 = math.exp %56 : vector<1x8x1xf32>
    %58 = vector.broadcast %55 : vector<1x8x1xf32> to vector<1x8x8xf32>
    %59 = arith.subf %50, %58 : vector<1x8x8xf32>
    %60 = math.exp %59 : vector<1x8x8xf32>
    %c1_45 = arith.constant 1 : index
    %c0_46 = arith.constant 0 : index
    %c0_47 = arith.constant 0 : index
    %c0_48 = arith.constant 0 : index
    %61 = vector.load %arg13[%c1_45, %c0_46, %c0_47, %c0_48] : memref<4x1x8x1xf32, #tpu.memory_space<vmem>>, vector<1x1x8x1xf32>
    %62 = vector.shape_cast %61 : vector<1x1x8x1xf32> to vector<1x8x1xf32>
    %63 = arith.mulf %57, %62 : vector<1x8x1xf32>
    %cst_49 = arith.constant dense<0.000000e+00> : vector<1x8xf32>
    %64 = vector.multi_reduction <add>, %60, %cst_49 [2] : vector<1x8x8xf32> to vector<1x8xf32>
    %65 = vector.shape_cast %64 : vector<1x8xf32> to vector<1x8x1xf32>
    %66 = arith.addf %63, %65 : vector<1x8x1xf32>
    %c1_50 = arith.constant 1 : index
    %c0_51 = arith.constant 0 : index
    %c0_52 = arith.constant 0 : index
    %c0_53 = arith.constant 0 : index
    %67 = vector.load %arg13[%c1_50, %c0_51, %c0_52, %c0_53] : memref<4x1x8x1xf32, #tpu.memory_space<vmem>>, vector<1x1x8x1xf32>
    %68 = vector.shape_cast %67 : vector<1x1x8x1xf32> to vector<1x8x1xf32>
    %69 = vector.shape_cast %66 : vector<1x8x1xf32> to vector<1x1x8x1xf32>
    tpu.vector_store %arg13[%c1_50, %c0_51, %c0_52, %c0_53], %69 {strides = array<i32>} : memref<4x1x8x1xf32, #tpu.memory_space<vmem>>, vector<1x1x8x1xf32>,
    %70 = arith.truncf %60 : vector<1x8x8xf32> to vector<1x8x8xbf16>
    "tpu.trace_start"() <{level = 10 : i32, message = "bqk,bkd->bqd"}> : () -> ()
    %cst_54 = arith.constant dense<0.000000e+00> : vector<1x8x8xf32>
    %71 = tpu.matmul %70, %49, %cst_54 {dimension_numbers = #tpu.dot_dimension_numbers<[2], [1], [1], [2], [0, 0, 0, 1, 1, 2], [0], [0]>} : vector<1x8x8xbf16>, vector<1x8x8xbf16>, vector<1x8x8xf32> -> vector<1x8x8xf32>
    "tpu.trace_stop"() : () -> ()
    %c0_55 = arith.constant 0 : index
    %c0_56 = arith.constant 0 : index
    %c8 = arith.constant 8 : index
    %72 = vector.load %arg14[%c0_55, %c0_56, %c8] : memref<1x8x32xf32, #tpu.memory_space<vmem>>, vector<1x8x8xf32>
    %73 = vector.broadcast %57 : vector<1x8x1xf32> to vector<1x8x8xf32>
    %74 = arith.mulf %73, %72 : vector<1x8x8xf32>
    %75 = arith.addf %74, %71 : vector<1x8x8xf32>
    %c0_57 = arith.constant 0 : index
    %c0_58 = arith.constant 0 : index
    %c8_59 = arith.constant 8 : index
    %76 = vector.load %arg14[%c0_57, %c0_58, %c8_59] : memref<1x8x32xf32, #tpu.memory_space<vmem>>, vector<1x8x8xf32>
    tpu.vector_store %arg14[%c0_57, %c0_58, %c8_59], %75 {strides = array<i32>} : memref<1x8x32xf32, #tpu.memory_space<vmem>>, vector<1x8x8xf32>,
    %c1_60 = arith.constant 1 : index
    %c0_61 = arith.constant 0 : index
    %c0_62 = arith.constant 0 : index
    %c0_63 = arith.constant 0 : index
    %77 = vector.load %arg12[%c1_60, %c0_61, %c0_62, %c0_63] : memref<4x1x8x1xf32, #tpu.memory_space<vmem>>, vector<1x1x8x1xf32>
    %78 = vector.shape_cast %77 : vector<1x1x8x1xf32> to vector<1x8x1xf32>
    %79 = vector.shape_cast %55 : vector<1x8x1xf32> to vector<1x1x8x1xf32>
    tpu.vector_store %arg12[%c1_60, %c0_61, %c0_62, %c0_63], %79 {strides = array<i32>} : memref<4x1x8x1xf32, #tpu.memory_space<vmem>>, vector<1x1x8x1xf32>,
    %80 = vector.extract_strided_slice %13 {offsets = [0, 0, 16], sizes = [1, 8, 8], strides = [1, 1, 1]} : vector<1x8x32xbf16> to vector<1x8x8xbf16>
    %81 = vector.extract_strided_slice %9 {offsets = [0, 0, 16], sizes = [1, 8, 8], strides = [1, 1, 1]} : vector<1x8x32xbf16> to vector<1x8x8xbf16>
    %82 = vector.extract_strided_slice %12 {offsets = [0, 0, 16], sizes = [1, 8, 8], strides = [1, 1, 1]} : vector<1x8x32xbf16> to vector<1x8x8xbf16>
    "tpu.trace_start"() <{level = 10 : i32, message = "bqd,bkd->bqk"}> : () -> ()
    %cst_64 = arith.constant dense<0.000000e+00> : vector<1x8x8xf32>
    %83 = tpu.matmul %80, %81, %cst_64 {dimension_numbers = #tpu.dot_dimension_numbers<[2], [2], [1], [1], [0, 0, 0, 1, 1, 1], [0], [0]>} : vector<1x8x8xbf16>, vector<1x8x8xbf16>, vector<1x8x8xf32> -> vector<1x8x8xf32>
    "tpu.trace_stop"() : () -> ()
    %c2 = arith.constant 2 : index
    %c0_65 = arith.constant 0 : index
    %c0_66 = arith.constant 0 : index
    %c0_67 = arith.constant 0 : index
    %84 = vector.load %arg12[%c2, %c0_65, %c0_66, %c0_67] : memref<4x1x8x1xf32, #tpu.memory_space<vmem>>, vector<1x1x8x1xf32>
    %85 = vector.shape_cast %84 : vector<1x1x8x1xf32> to vector<1x8x1xf32>
    %cst_68 = arith.constant dense<0xFF800000> : vector<1x8xf32>
    %86 = vector.multi_reduction <maximumf>, %83, %cst_68 [2] : vector<1x8x8xf32> to vector<1x8xf32>
    %87 = vector.shape_cast %86 : vector<1x8xf32> to vector<1x8x1xf32>
    %88 = arith.maximumf %85, %87 : vector<1x8x1xf32>
    %89 = arith.subf %85, %88 : vector<1x8x1xf32>
    %90 = math.exp %89 : vector<1x8x1xf32>
    %91 = vector.broadcast %88 : vector<1x8x1xf32> to vector<1x8x8xf32>
    %92 = arith.subf %83, %91 : vector<1x8x8xf32>
    %93 = math.exp %92 : vector<1x8x8xf32>
    %c2_69 = arith.constant 2 : index
    %c0_70 = arith.constant 0 : index
    %c0_71 = arith.constant 0 : index
    %c0_72 = arith.constant 0 : index
    %94 = vector.load %arg13[%c2_69, %c0_70, %c0_71, %c0_72] : memref<4x1x8x1xf32, #tpu.memory_space<vmem>>, vector<1x1x8x1xf32>
    %95 = vector.shape_cast %94 : vector<1x1x8x1xf32> to vector<1x8x1xf32>
    %96 = arith.mulf %90, %95 : vector<1x8x1xf32>
    %cst_73 = arith.constant dense<0.000000e+00> : vector<1x8xf32>
    %97 = vector.multi_reduction <add>, %93, %cst_73 [2] : vector<1x8x8xf32> to vector<1x8xf32>
    %98 = vector.shape_cast %97 : vector<1x8xf32> to vector<1x8x1xf32>
    %99 = arith.addf %96, %98 : vector<1x8x1xf32>
    %c2_74 = arith.constant 2 : index
    %c0_75 = arith.constant 0 : index
    %c0_76 = arith.constant 0 : index
    %c0_77 = arith.constant 0 : index
    %100 = vector.load %arg13[%c2_74, %c0_75, %c0_76, %c0_77] : memref<4x1x8x1xf32, #tpu.memory_space<vmem>>, vector<1x1x8x1xf32>
    %101 = vector.shape_cast %100 : vector<1x1x8x1xf32> to vector<1x8x1xf32>
    %102 = vector.shape_cast %99 : vector<1x8x1xf32> to vector<1x1x8x1xf32>
    tpu.vector_store %arg13[%c2_74, %c0_75, %c0_76, %c0_77], %102 {strides = array<i32>} : memref<4x1x8x1xf32, #tpu.memory_space<vmem>>, vector<1x1x8x1xf32>,
    %103 = arith.truncf %93 : vector<1x8x8xf32> to vector<1x8x8xbf16>
    "tpu.trace_start"() <{level = 10 : i32, message = "bqk,bkd->bqd"}> : () -> ()
    %cst_78 = arith.constant dense<0.000000e+00> : vector<1x8x8xf32>
    %104 = tpu.matmul %103, %82, %cst_78 {dimension_numbers = #tpu.dot_dimension_numbers<[2], [1], [1], [2], [0, 0, 0, 1, 1, 2], [0], [0]>} : vector<1x8x8xbf16>, vector<1x8x8xbf16>, vector<1x8x8xf32> -> vector<1x8x8xf32>
    "tpu.trace_stop"() : () -> ()
    %c0_79 = arith.constant 0 : index
    %c0_80 = arith.constant 0 : index
    %c16 = arith.constant 16 : index
    %105 = vector.load %arg14[%c0_79, %c0_80, %c16] : memref<1x8x32xf32, #tpu.memory_space<vmem>>, vector<1x8x8xf32>
    %106 = vector.broadcast %90 : vector<1x8x1xf32> to vector<1x8x8xf32>
    %107 = arith.mulf %106, %105 : vector<1x8x8xf32>
    %108 = arith.addf %107, %104 : vector<1x8x8xf32>
    %c0_81 = arith.constant 0 : index
    %c0_82 = arith.constant 0 : index
    %c16_83 = arith.constant 16 : index
    %109 = vector.load %arg14[%c0_81, %c0_82, %c16_83] : memref<1x8x32xf32, #tpu.memory_space<vmem>>, vector<1x8x8xf32>
    tpu.vector_store %arg14[%c0_81, %c0_82, %c16_83], %108 {strides = array<i32>} : memref<1x8x32xf32, #tpu.memory_space<vmem>>, vector<1x8x8xf32>,
    %c2_84 = arith.constant 2 : index
    %c0_85 = arith.constant 0 : index
    %c0_86 = arith.constant 0 : index
    %c0_87 = arith.constant 0 : index
    %110 = vector.load %arg12[%c2_84, %c0_85, %c0_86, %c0_87] : memref<4x1x8x1xf32, #tpu.memory_space<vmem>>, vector<1x1x8x1xf32>
    %111 = vector.shape_cast %110 : vector<1x1x8x1xf32> to vector<1x8x1xf32>
    %112 = vector.shape_cast %88 : vector<1x8x1xf32> to vector<1x1x8x1xf32>
    tpu.vector_store %arg12[%c2_84, %c0_85, %c0_86, %c0_87], %112 {strides = array<i32>} : memref<4x1x8x1xf32, #tpu.memory_space<vmem>>, vector<1x1x8x1xf32>,
    %113 = vector.extract_strided_slice %13 {offsets = [0, 0, 24], sizes = [1, 8, 8], strides = [1, 1, 1]} : vector<1x8x32xbf16> to vector<1x8x8xbf16>
    %114 = vector.extract_strided_slice %9 {offsets = [0, 0, 24], sizes = [1, 8, 8], strides = [1, 1, 1]} : vector<1x8x32xbf16> to vector<1x8x8xbf16>
    %115 = vector.extract_strided_slice %12 {offsets = [0, 0, 24], sizes = [1, 8, 8], strides = [1, 1, 1]} : vector<1x8x32xbf16> to vector<1x8x8xbf16>
    "tpu.trace_start"() <{level = 10 : i32, message = "bqd,bkd->bqk"}> : () -> ()
    %cst_88 = arith.constant dense<0.000000e+00> : vector<1x8x8xf32>
    %116 = tpu.matmul %113, %114, %cst_88 {dimension_numbers = #tpu.dot_dimension_numbers<[2], [2], [1], [1], [0, 0, 0, 1, 1, 1], [0], [0]>} : vector<1x8x8xbf16>, vector<1x8x8xbf16>, vector<1x8x8xf32> -> vector<1x8x8xf32>
    "tpu.trace_stop"() : () -> ()
    %c3 = arith.constant 3 : index
    %c0_89 = arith.constant 0 : index
    %c0_90 = arith.constant 0 : index
    %c0_91 = arith.constant 0 : index
    %117 = vector.load %arg12[%c3, %c0_89, %c0_90, %c0_91] : memref<4x1x8x1xf32, #tpu.memory_space<vmem>>, vector<1x1x8x1xf32>
    %118 = vector.shape_cast %117 : vector<1x1x8x1xf32> to vector<1x8x1xf32>
    %cst_92 = arith.constant dense<0xFF800000> : vector<1x8xf32>
    %119 = vector.multi_reduction <maximumf>, %116, %cst_92 [2] : vector<1x8x8xf32> to vector<1x8xf32>
    %120 = vector.shape_cast %119 : vector<1x8xf32> to vector<1x8x1xf32>
    %121 = arith.maximumf %118, %120 : vector<1x8x1xf32>
    %122 = arith.subf %118, %121 : vector<1x8x1xf32>
    %123 = math.exp %122 : vector<1x8x1xf32>
    %124 = vector.broadcast %121 : vector<1x8x1xf32> to vector<1x8x8xf32>
    %125 = arith.subf %116, %124 : vector<1x8x8xf32>
    %126 = math.exp %125 : vector<1x8x8xf32>
    %c3_93 = arith.constant 3 : index
    %c0_94 = arith.constant 0 : index
    %c0_95 = arith.constant 0 : index
    %c0_96 = arith.constant 0 : index
    %127 = vector.load %arg13[%c3_93, %c0_94, %c0_95, %c0_96] : memref<4x1x8x1xf32, #tpu.memory_space<vmem>>, vector<1x1x8x1xf32>
    %128 = vector.shape_cast %127 : vector<1x1x8x1xf32> to vector<1x8x1xf32>
    %129 = arith.mulf %123, %128 : vector<1x8x1xf32>
    %cst_97 = arith.constant dense<0.000000e+00> : vector<1x8xf32>
    %130 = vector.multi_reduction <add>, %126, %cst_97 [2] : vector<1x8x8xf32> to vector<1x8xf32>
    %131 = vector.shape_cast %130 : vector<1x8xf32> to vector<1x8x1xf32>
    %132 = arith.addf %129, %131 : vector<1x8x1xf32>
    %c3_98 = arith.constant 3 : index
    %c0_99 = arith.constant 0 : index
    %c0_100 = arith.constant 0 : index
    %c0_101 = arith.constant 0 : index
    %133 = vector.load %arg13[%c3_98, %c0_99, %c0_100, %c0_101] : memref<4x1x8x1xf32, #tpu.memory_space<vmem>>, vector<1x1x8x1xf32>
    %134 = vector.shape_cast %133 : vector<1x1x8x1xf32> to vector<1x8x1xf32>
    %135 = vector.shape_cast %132 : vector<1x8x1xf32> to vector<1x1x8x1xf32>
    tpu.vector_store %arg13[%c3_98, %c0_99, %c0_100, %c0_101], %135 {strides = array<i32>} : memref<4x1x8x1xf32, #tpu.memory_space<vmem>>, vector<1x1x8x1xf32>,
    %136 = arith.truncf %126 : vector<1x8x8xf32> to vector<1x8x8xbf16>
    "tpu.trace_start"() <{level = 10 : i32, message = "bqk,bkd->bqd"}> : () -> ()
    %cst_102 = arith.constant dense<0.000000e+00> : vector<1x8x8xf32>
    %137 = tpu.matmul %136, %115, %cst_102 {dimension_numbers = #tpu.dot_dimension_numbers<[2], [1], [1], [2], [0, 0, 0, 1, 1, 2], [0], [0]>} : vector<1x8x8xbf16>, vector<1x8x8xbf16>, vector<1x8x8xf32> -> vector<1x8x8xf32>
    "tpu.trace_stop"() : () -> ()
    %c0_103 = arith.constant 0 : index
    %c0_104 = arith.constant 0 : index
    %c24 = arith.constant 24 : index
    %138 = vector.load %arg14[%c0_103, %c0_104, %c24] : memref<1x8x32xf32, #tpu.memory_space<vmem>>, vector<1x8x8xf32>
    %139 = vector.broadcast %123 : vector<1x8x1xf32> to vector<1x8x8xf32>
    %140 = arith.mulf %139, %138 : vector<1x8x8xf32>
    %141 = arith.addf %140, %137 : vector<1x8x8xf32>
    %c0_105 = arith.constant 0 : index
    %c0_106 = arith.constant 0 : index
    %c24_107 = arith.constant 24 : index
    %142 = vector.load %arg14[%c0_105, %c0_106, %c24_107] : memref<1x8x32xf32, #tpu.memory_space<vmem>>, vector<1x8x8xf32>
    tpu.vector_store %arg14[%c0_105, %c0_106, %c24_107], %141 {strides = array<i32>} : memref<1x8x32xf32, #tpu.memory_space<vmem>>, vector<1x8x8xf32>,
    %c3_108 = arith.constant 3 : index
    %c0_109 = arith.constant 0 : index
    %c0_110 = arith.constant 0 : index
    %c0_111 = arith.constant 0 : index
    %143 = vector.load %arg12[%c3_108, %c0_109, %c0_110, %c0_111] : memref<4x1x8x1xf32, #tpu.memory_space<vmem>>, vector<1x1x8x1xf32>
    %144 = vector.shape_cast %143 : vector<1x1x8x1xf32> to vector<1x8x1xf32>
    %145 = vector.shape_cast %121 : vector<1x8x1xf32> to vector<1x1x8x1xf32>
    tpu.vector_store %arg12[%c3_108, %c0_109, %c0_110, %c0_111], %145 {strides = array<i32>} : memref<4x1x8x1xf32, #tpu.memory_space<vmem>>, vector<1x1x8x1xf32>,
    %c0_i32_112 = arith.constant 0 : i32
    %146 = arith.cmpi eq, %arg1, %c0_i32_112 : i32
    %147 = arith.extui %146 : i1 to i32
    %c0_i32_113 = arith.constant 0 : i32
    %148 = arith.cmpi ne, %147, %c0_i32_113 : i32
    scf.if %148 {
      %c0_114 = arith.constant 0 : index
      %c0_115 = arith.constant 0 : index
      %c0_116 = arith.constant 0 : index
      %c0_117 = arith.constant 0 : index
      %149 = vector.load %arg13[%c0_114, %c0_115, %c0_116, %c0_117] : memref<4x1x8x1xf32, #tpu.memory_space<vmem>>, vector<1x1x8x1xf32>
      %150 = vector.shape_cast %149 : vector<1x1x8x1xf32> to vector<1x8x1xf32>
      %151 = tpu.reciprocal %150 {approx = true} : vector<1x8x1xf32> -> vector<1x8x1xf32>
      %c0_118 = arith.constant 0 : index
      %c0_119 = arith.constant 0 : index
      %c0_120 = arith.constant 0 : index
      %152 = vector.load %arg14[%c0_118, %c0_119, %c0_120] : memref<1x8x32xf32, #tpu.memory_space<vmem>>, vector<1x8x8xf32>
      %153 = vector.broadcast %151 : vector<1x8x1xf32> to vector<1x8x8xf32>
      %154 = arith.mulf %152, %153 : vector<1x8x8xf32>
      %c0_121 = arith.constant 0 : index
      %c0_122 = arith.constant 0 : index
      %c0_123 = arith.constant 0 : index
      %155 = vector.load %arg14[%c0_121, %c0_122, %c0_123] : memref<1x8x32xf32, #tpu.memory_space<vmem>>, vector<1x8x8xf32>
      tpu.vector_store %arg14[%c0_121, %c0_122, %c0_123], %154 {strides = array<i32>} : memref<1x8x32xf32, #tpu.memory_space<vmem>>, vector<1x8x8xf32>,
      %c1_124 = arith.constant 1 : index
      %c0_125 = arith.constant 0 : index
      %c0_126 = arith.constant 0 : index
      %c0_127 = arith.constant 0 : index
      %156 = vector.load %arg13[%c1_124, %c0_125, %c0_126, %c0_127] : memref<4x1x8x1xf32, #tpu.memory_space<vmem>>, vector<1x1x8x1xf32>
      %157 = vector.shape_cast %156 : vector<1x1x8x1xf32> to vector<1x8x1xf32>
      %158 = tpu.reciprocal %157 {approx = true} : vector<1x8x1xf32> -> vector<1x8x1xf32>
      %c0_128 = arith.constant 0 : index
      %c0_129 = arith.constant 0 : index
      %c8_130 = arith.constant 8 : index
      %159 = vector.load %arg14[%c0_128, %c0_129, %c8_130] : memref<1x8x32xf32, #tpu.memory_space<vmem>>, vector<1x8x8xf32>
      %160 = vector.broadcast %158 : vector<1x8x1xf32> to vector<1x8x8xf32>
      %161 = arith.mulf %159, %160 : vector<1x8x8xf32>
      %c0_131 = arith.constant 0 : index
      %c0_132 = arith.constant 0 : index
      %c8_133 = arith.constant 8 : index
      %162 = vector.load %arg14[%c0_131, %c0_132, %c8_133] : memref<1x8x32xf32, #tpu.memory_space<vmem>>, vector<1x8x8xf32>
      tpu.vector_store %arg14[%c0_131, %c0_132, %c8_133], %161 {strides = array<i32>} : memref<1x8x32xf32, #tpu.memory_space<vmem>>, vector<1x8x8xf32>,
      %c2_134 = arith.constant 2 : index
      %c0_135 = arith.constant 0 : index
      %c0_136 = arith.constant 0 : index
      %c0_137 = arith.constant 0 : index
      %163 = vector.load %arg13[%c2_134, %c0_135, %c0_136, %c0_137] : memref<4x1x8x1xf32, #tpu.memory_space<vmem>>, vector<1x1x8x1xf32>
      %164 = vector.shape_cast %163 : vector<1x1x8x1xf32> to vector<1x8x1xf32>
      %165 = tpu.reciprocal %164 {approx = true} : vector<1x8x1xf32> -> vector<1x8x1xf32>
      %c0_138 = arith.constant 0 : index
      %c0_139 = arith.constant 0 : index
      %c16_140 = arith.constant 16 : index
      %166 = vector.load %arg14[%c0_138, %c0_139, %c16_140] : memref<1x8x32xf32, #tpu.memory_space<vmem>>, vector<1x8x8xf32>
      %167 = vector.broadcast %165 : vector<1x8x1xf32> to vector<1x8x8xf32>
      %168 = arith.mulf %166, %167 : vector<1x8x8xf32>
      %c0_141 = arith.constant 0 : index
      %c0_142 = arith.constant 0 : index
      %c16_143 = arith.constant 16 : index
      %169 = vector.load %arg14[%c0_141, %c0_142, %c16_143] : memref<1x8x32xf32, #tpu.memory_space<vmem>>, vector<1x8x8xf32>
      tpu.vector_store %arg14[%c0_141, %c0_142, %c16_143], %168 {strides = array<i32>} : memref<1x8x32xf32, #tpu.memory_space<vmem>>, vector<1x8x8xf32>,
      %c3_144 = arith.constant 3 : index
      %c0_145 = arith.constant 0 : index
      %c0_146 = arith.constant 0 : index
      %c0_147 = arith.constant 0 : index
      %170 = vector.load %arg13[%c3_144, %c0_145, %c0_146, %c0_147] : memref<4x1x8x1xf32, #tpu.memory_space<vmem>>, vector<1x1x8x1xf32>
      %171 = vector.shape_cast %170 : vector<1x1x8x1xf32> to vector<1x8x1xf32>
      %172 = tpu.reciprocal %171 {approx = true} : vector<1x8x1xf32> -> vector<1x8x1xf32>
      %c0_148 = arith.constant 0 : index
      %c0_149 = arith.constant 0 : index
      %c24_150 = arith.constant 24 : index
      %173 = vector.load %arg14[%c0_148, %c0_149, %c24_150] : memref<1x8x32xf32, #tpu.memory_space<vmem>>, vector<1x8x8xf32>
      %174 = vector.broadcast %172 : vector<1x8x1xf32> to vector<1x8x8xf32>
      %175 = arith.mulf %173, %174 : vector<1x8x8xf32>
      %c0_151 = arith.constant 0 : index
      %c0_152 = arith.constant 0 : index
      %c24_153 = arith.constant 24 : index
      %176 = vector.load %arg14[%c0_151, %c0_152, %c24_153] : memref<1x8x32xf32, #tpu.memory_space<vmem>>, vector<1x8x8xf32>
      tpu.vector_store %arg14[%c0_151, %c0_152, %c24_153], %175 {strides = array<i32>} : memref<1x8x32xf32, #tpu.memory_space<vmem>>, vector<1x8x8xf32>,
      %c0_154 = arith.constant 0 : index
      %c0_155 = arith.constant 0 : index
      %c0_156 = arith.constant 0 : index
      %177 = vector.load %arg14[%c0_154, %c0_155, %c0_156] : memref<1x8x32xf32, #tpu.memory_space<vmem>>, vector<1x8x32xf32>
      %178 = arith.truncf %177 : vector<1x8x32xf32> to vector<1x8x32xbf16>
      %c0_157 = arith.constant 0 : index
      %c0_158 = arith.constant 0 : index
      %179 = vector.load %arg8[%c0_157, %c0_158] : memref<32x32xbf16, #tpu.memory_space<vmem>>, vector<32x32xbf16>
      "tpu.trace_start"() <{level = 10 : i32, message = "bqe,ef->bqf"}> : () -> ()
      %cst_159 = arith.constant dense<0.000000e+00> : vector<1x8x32xf32>
      %180 = tpu.matmul %178, %179, %cst_159 {dimension_numbers = #tpu.dot_dimension_numbers<[2], [0], [0, 1], [1], [0, 0, 0, 1, 1, 1], [], []>} : vector<1x8x32xbf16>, vector<32x32xbf16>, vector<1x8x32xf32> -> vector<1x8x32xf32>
      "tpu.trace_stop"() : () -> ()
      %c0_160 = arith.constant 0 : index
      %c0_161 = arith.constant 0 : index
      %181 = vector.load %arg9[%c0_160, %c0_161] : memref<1x32xf32, #tpu.memory_space<vmem>>, vector<1x32xf32>
      %182 = vector.shape_cast %181 : vector<1x32xf32> to vector<1x1x32xf32>
      %183 = vector.broadcast %182 : vector<1x1x32xf32> to vector<1x8x32xf32>
      %184 = arith.addf %180, %183 : vector<1x8x32xf32>
      %c0_162 = arith.constant 0 : index
      %c0_163 = arith.constant 0 : index
      %c0_164 = arith.constant 0 : index
      %185 = vector.load %arg10[%c0_162, %c0_163, %c0_164] : memref<1x8x32xf32, #tpu.memory_space<vmem>>, vector<1x8x32xf32>
      tpu.vector_store %arg10[%c0_162, %c0_163, %c0_164], %184 {strides = array<i32>} : memref<1x8x32xf32, #tpu.memory_space<vmem>>, vector<1x8x32xf32>,
    } else {
    }
    return
  }
  func.func @transform_0(%arg0: i32, %arg1: i32) -> (i32, i32, i32) {
    %c0_i32 = arith.constant 0 : i32
    %c0_i32_0 = arith.constant 0 : i32
    %c0_i32_1 = arith.constant 0 : i32
    return %arg0, %c0_i32, %c0_i32_0 : i32, i32, i32
  }
  func.func @transform_1(%arg0: i32, %arg1: i32) -> (i32, i32, i32) {
    %c0_i32 = arith.constant 0 : i32
    %c0_i32_0 = arith.constant 0 : i32
    return %arg0, %arg1, %c0_i32 : i32, i32, i32
  }
  func.func @transform_2(%arg0: i32, %arg1: i32) -> (i32, i32, i32) {
    %c0_i32 = arith.constant 0 : i32
    %c0_i32_0 = arith.constant 0 : i32
    return %arg0, %arg1, %c0_i32 : i32, i32, i32
  }
  func.func @transform_3(%arg0: i32, %arg1: i32) -> (i32, i32) {
    %c0_i32 = arith.constant 0 : i32
    %c0_i32_0 = arith.constant 0 : i32
    %c0_i32_1 = arith.constant 0 : i32
    return %c0_i32, %c0_i32_0 : i32, i32
  }
  func.func @transform_4(%arg0: i32, %arg1: i32) -> (i32, i32) {
    %c0_i32 = arith.constant 0 : i32
    %c0_i32_0 = arith.constant 0 : i32
    %c0_i32_1 = arith.constant 0 : i32
    return %c0_i32, %c0_i32_0 : i32, i32
  }
  func.func @transform_5(%arg0: i32, %arg1: i32) -> (i32, i32) {
    %c0_i32 = arith.constant 0 : i32
    %c0_i32_0 = arith.constant 0 : i32
    %c0_i32_1 = arith.constant 0 : i32
    return %c0_i32, %c0_i32_0 : i32, i32
  }
  func.func @transform_6(%arg0: i32, %arg1: i32) -> (i32, i32) {
    %c0_i32 = arith.constant 0 : i32
    %c0_i32_0 = arith.constant 0 : i32
    %c0_i32_1 = arith.constant 0 : i32
    return %c0_i32, %c0_i32_0 : i32, i32
  }
  func.func @transform_7(%arg0: i32, %arg1: i32) -> (i32, i32) {
    %c0_i32 = arith.constant 0 : i32
    %c0_i32_0 = arith.constant 0 : i32
    %c0_i32_1 = arith.constant 0 : i32
    return %c0_i32, %c0_i32_0 : i32, i32
  }
  func.func @transform_8(%arg0: i32, %arg1: i32) -> (i32, i32, i32) {
    %c0_i32 = arith.constant 0 : i32
    %c0_i32_0 = arith.constant 0 : i32
    %c0_i32_1 = arith.constant 0 : i32
    return %arg0, %c0_i32, %c0_i32_0 : i32, i32, i32
  }
}

</mosaic_0001>

<llo_original>
// kernel: tpu_custom_call.1
$region0: #{tpu_custom_call.1}
  #allocation0 [shape = 'u32[]', space=smem, size = 0x4, offset = 0x4, fixed_abs, tag = 'smem constant byte address 0x4 - core index']
  #allocation1 [shape = 'u32[72,128]{1,0:T(1,128)}', space=vmem, size = 0x9000, scoped, tag = 'internal scratch']
  #allocation2 [shape = 'bf16[1,8,32]{2,1,0:T(8,128)(2,1)}', space=vmem, size = 0x800, scoped, tag = 'scratch operand']
  #allocation3 [shape = 'f32[4,1,8,1]{3,2,1,0:T(8,128)}', space=vmem, size = 0x4000, scoped, tag = 'scratch operand']
  #allocation4 [shape = 'f32[4,1,8,1]{3,2,1,0:T(8,128)}', space=vmem, size = 0x4000, scoped, tag = 'scratch operand']
  #allocation5 [shape = 'f32[1,8,32]{2,1,0:T(8,128)}', space=vmem, size = 0x1000, scoped, tag = 'scratch operand']
  %s0 = inlined_call_operand.hbm [shape: f32[2,8,32], index: 0, kind: input, shape index: {}]
  %s1 = inlined_call_operand.hbm [shape: f32[2,8,32], index: 1, kind: input, shape index: {}]
  %s2 = inlined_call_operand.hbm [shape: f32[2,8,32], index: 2, kind: input, shape index: {}]
  %s3 = inlined_call_operand.hbm [shape: bf16[32,32], index: 3, kind: input, shape index: {}]
  %s4 = inlined_call_operand.hbm [shape: bf16[32,32], index: 4, kind: input, shape index: {}]
  %s5 = inlined_call_operand.hbm [shape: bf16[32,32], index: 5, kind: input, shape index: {}]
  %s6 = inlined_call_operand.hbm [shape: bf16[32,32], index: 6, kind: input, shape index: {}]
  %s7 = inlined_call_operand.vmem [shape: f32[1,32], index: 7, kind: input, shape index: {}]
  %s8 = inlined_call_operand.hbm [shape: f32[2,8,32], index: 8, kind: output, shape index: {}]
  %s9 = sld [smem:[#allocation0]]
  $region101: #{tpu_custom_call.1} parent=0
    _
  %s11 = ssub.s32 1, %s9
  %s12 = scalar_select 0, %s11, %s9
  $region1: #{tpu_custom_call.1} parent=0
    #allocation6 [shape = 'u8[8192]{0}', space=vmem, size = 0x2000, scoped, tag = 'input window, operand 0']
    #allocation7 [shape = 's32[2]{0}', space=sflag, size = 0x8, scoped, tag = 'scoped memory for tpu_custom_call.1']
    #allocation8 [shape = 's32[2]{0}', space=sflag, size = 0x8, scoped, tag = 'scoped memory for tpu_custom_call.1']
    #allocation9 [shape = 'u8[8192]{0}', space=vmem, size = 0x2000, scoped, tag = 'input window, operand 1']
    #allocation10 [shape = 's32[2]{0}', space=sflag, size = 0x8, scoped, tag = 'scoped memory for tpu_custom_call.1']
    #allocation11 [shape = 'u8[8192]{0}', space=vmem, size = 0x2000, scoped, tag = 'input window, operand 2']
    #allocation12 [shape = 'u8[8192]{0}', space=vmem, size = 0x2000, scoped, tag = 'input window, operand 3, single buffered']
    #allocation13 [shape = 's32[1]{0}', space=sflag, size = 0x4, scoped, tag = 'scoped memory for tpu_custom_call.1']
    #allocation14 [shape = 'u8[8192]{0}', space=vmem, size = 0x2000, scoped, tag = 'input window, operand 4, single buffered']
    #allocation15 [shape = 'u8[8192]{0}', space=vmem, size = 0x2000, scoped, tag = 'input window, operand 5, single buffered']
    #allocation16 [shape = 's32[1]{0}', space=sflag, size = 0x4, scoped, tag = 'scoped memory for tpu_custom_call.1']
    #allocation17 [shape = 'u8[8192]{0}', space=vmem, size = 0x2000, scoped, tag = 'input window, operand 6, single buffered']
    #allocation18 [shape = 'u8[8192]{0}', space=vmem, size = 0x2000, scoped, tag = 'output window, operand 0']
    %13 = vsyncpa [#allocation7], 0
    %s14 = scalar_lea.sflag [#allocation7], 1
    %15 = vsyncpa %s14, 0
    %16 = vsyncpa [#allocation10], 0
    %s17 = scalar_lea.sflag [#allocation10], 1
    %18 = vsyncpa %s17, 0
    %19 = vsyncpa [#allocation13], 0
    %20 = vsyncpa [#allocation16], 0
    %21 = vsyncpa [#allocation8], 0
    %s22 = scalar_lea.sflag [#allocation8], 1
    %23 = vsyncpa %s22, 0
    loop: start=0, step=1, limit=4
    $region2: #{tpu_custom_call.1} parent=1 // loop_pre_header
      _
    $region3: #{tpu_custom_call.1} parent=1 // loop_header
      %s25 = sphi 0, %s29
      %p26 = scmp.ge.s32.totalorder %s25, 4
      %s32 = sphi 0, %s44
      %s33 = sphi 0, %s40
      %s34 = sphi 0, %s32
      %s35 = sphi 0, %s33
      %s36 = sphi 0, %s34
      %s37 = sphi 0, %s35
      %s47 = sphi 0, %s49
      %s50 = sphi 0, %s47
      %s51 = sphi 0, %s50
      %s67 = sphi 0, %s51
      %s75 = sphi 0, %s77
      %s78 = sphi 0, %s75
      %s79 = sphi 0, %s78
      %s95 = sphi 0, %s79
      %s103 = sphi 0, %s105
      %s106 = sphi 0, %s103
      %s107 = sphi 0, %s106
      %s123 = sphi 0, %s107
      %s127 = sphi 0, %s127
      %s129 = sphi 0, %s127
      %s130 = sphi 0, %s129
      %s144 = sphi 0, %s130
      %s148 = sphi 0, %s148
      %s150 = sphi 0, %s148
      %s151 = sphi 0, %s150
      %s165 = sphi 0, %s151
      %s169 = sphi 0, %s169
      %s171 = sphi 0, %s169
      %s172 = sphi 0, %s171
      %s186 = sphi 0, %s172
      %s190 = sphi 0, %s190
      %s192 = sphi 0, %s190
      %s193 = sphi 0, %s192
      %s207 = sphi 0, %s193
      %s211 = sphi 0, %s211
      %s213 = sphi 0, %s211
      %s214 = sphi 0, %s213
      %s228 = sphi 0, %s214
      %s234 = sphi 0, %s236
      %s237 = sphi 0, %s234
      %s238 = sphi 0, %s237
      %s254 = sphi 0, %s238
    $region4: #{tpu_custom_call.1} parent=1 // loop_header_branch
      %28 = sbr.rel (%p26) target = $region8
    $region5: #{tpu_custom_call.1} parent=1 // loop_body
      %s30 = ssub.s32 %s25, 1
      %s31 = ssub.s32 %s25, 2
      %s38 = sadd.s32 1, %s33
      %p39 = scmp.ge.s32.totalorder %s38, 1
      %s40 = scalar_select %p39, 0, %s38
      %s41 = sadd.s32 1, %s32
      %s42 = scalar_select %p39, %s41, %s32
      %p43 = scmp.ge.s32.totalorder %s42, 2
      %s44 = scalar_select %p43, 0, %s42
      %s45 = ssub.s32 %s32, %s44
      %p46 = scmp.eq.s32.totalorder %s45, 0
      %s48 = sadd.s32 %s47, 1
      %s49 = scalar_select %p46, %s47, %s48
      %p52 = pneg %p46
      %p53 = scmp.eq.s32.totalorder %s25, 1
      %p54 = por %p52, %p53
      %p55 = scmp.ne.s32.totalorder %s47, %s50
      %p56 = scmp.eq.s32.totalorder %s25, 0
      %p57 = por %p55, %p56
      %p58 = scmp.ne.s32.totalorder %s47, %s50
      %p59 = scmp.eq.s32.totalorder %s30, 1
      %p60 = por %p58, %p59
      %p61 = scmp.ne.s32.totalorder %s50, %s51
      %p62 = scmp.eq.s32.totalorder %s30, 0
      %p63 = por %p61, %p62
      %p64 = scmp.ne.s32.totalorder %s50, %s51
      %p65 = scmp.eq.s32.totalorder %s31, 1
      %p66 = por %p64, %p65
      %p68 = scmp.ne.s32.totalorder %s51, %s67
      %p69 = scmp.eq.s32.totalorder %s31, 0
      %p70 = por %p68, %p69
      %s71 = ssub.s32 %s32, %s44
      %s72 = ssub.s32 %s33, %s40
      %s73 = sor.u32 %s71, %s72
      %p74 = scmp.eq.s32.totalorder %s73, 0
      %s76 = sadd.s32 %s75, 1
      %s77 = scalar_select %p74, %s75, %s76
      %p80 = pneg %p74
      %p81 = scmp.eq.s32.totalorder %s25, 1
      %p82 = por %p80, %p81
      %p83 = scmp.ne.s32.totalorder %s75, %s78
      %p84 = scmp.eq.s32.totalorder %s25, 0
      %p85 = por %p83, %p84
      %p86 = scmp.ne.s32.totalorder %s75, %s78
      %p87 = scmp.eq.s32.totalorder %s30, 1
      %p88 = por %p86, %p87
      %p89 = scmp.ne.s32.totalorder %s78, %s79
      %p90 = scmp.eq.s32.totalorder %s30, 0
      %p91 = por %p89, %p90
      %p92 = scmp.ne.s32.totalorder %s78, %s79
      %p93 = scmp.eq.s32.totalorder %s31, 1
      %p94 = por %p92, %p93
      %p96 = scmp.ne.s32.totalorder %s79, %s95
      %p97 = scmp.eq.s32.totalorder %s31, 0
      %p98 = por %p96, %p97
      %s99 = ssub.s32 %s32, %s44
      %s100 = ssub.s32 %s33, %s40
      %s101 = sor.u32 %s99, %s100
      %p102 = scmp.eq.s32.totalorder %s101, 0
      %s104 = sadd.s32 %s103, 1
      %s105 = scalar_select %p102, %s103, %s104
      %p108 = pneg %p102
      %p109 = scmp.eq.s32.totalorder %s25, 1
      %p110 = por %p108, %p109
      %p111 = scmp.ne.s32.totalorder %s103, %s106
      %p112 = scmp.eq.s32.totalorder %s25, 0
      %p113 = por %p111, %p112
      %p114 = scmp.ne.s32.totalorder %s103, %s106
      %p115 = scmp.eq.s32.totalorder %s30, 1
      %p116 = por %p114, %p115
      %p117 = scmp.ne.s32.totalorder %s106, %s107
      %p118 = scmp.eq.s32.totalorder %s30, 0
      %p119 = por %p117, %p118
      %p120 = scmp.ne.s32.totalorder %s106, %s107
      %p121 = scmp.eq.s32.totalorder %s31, 1
      %p122 = por %p120, %p121
      %p124 = scmp.ne.s32.totalorder %s107, %s123
      %p125 = scmp.eq.s32.totalorder %s31, 0
      %p126 = por %p124, %p125
      %s128 = sadd.s32 %s127, 1
      %p131 = scmp.eq.s32.totalorder %s25, 1
      %p132 = scmp.ne.s32.totalorder %s127, %s129
      %p133 = scmp.eq.s32.totalorder %s25, 0
      %p134 = por %p132, %p133
      %p135 = scmp.ne.s32.totalorder %s127, %s129
      %p136 = scmp.eq.s32.totalorder %s30, 1
      %p137 = por %p135, %p136
      %p138 = scmp.ne.s32.totalorder %s129, %s130
      %p139 = scmp.eq.s32.totalorder %s30, 0
      %p140 = por %p138, %p139
      %p141 = scmp.ne.s32.totalorder %s129, %s130
      %p142 = scmp.eq.s32.totalorder %s31, 1
      %p143 = por %p141, %p142
      %p145 = scmp.ne.s32.totalorder %s130, %s144
      %p146 = scmp.eq.s32.totalorder %s31, 0
      %p147 = por %p145, %p146
      %s149 = sadd.s32 %s148, 1
      %p152 = scmp.eq.s32.totalorder %s25, 1
      %p153 = scmp.ne.s32.totalorder %s148, %s150
      %p154 = scmp.eq.s32.totalorder %s25, 0
      %p155 = por %p153, %p154
      %p156 = scmp.ne.s32.totalorder %s148, %s150
      %p157 = scmp.eq.s32.totalorder %s30, 1
      %p158 = por %p156, %p157
      %p159 = scmp.ne.s32.totalorder %s150, %s151
      %p160 = scmp.eq.s32.totalorder %s30, 0
      %p161 = por %p159, %p160
      %p162 = scmp.ne.s32.totalorder %s150, %s151
      %p163 = scmp.eq.s32.totalorder %s31, 1
      %p164 = por %p162, %p163
      %p166 = scmp.ne.s32.totalorder %s151, %s165
      %p167 = scmp.eq.s32.totalorder %s31, 0
      %p168 = por %p166, %p167
      %s170 = sadd.s32 %s169, 1
      %p173 = scmp.eq.s32.totalorder %s25, 1
      %p174 = scmp.ne.s32.totalorder %s169, %s171
      %p175 = scmp.eq.s32.totalorder %s25, 0
      %p176 = por %p174, %p175
      %p177 = scmp.ne.s32.totalorder %s169, %s171
      %p178 = scmp.eq.s32.totalorder %s30, 1
      %p179 = por %p177, %p178
      %p180 = scmp.ne.s32.totalorder %s171, %s172
      %p181 = scmp.eq.s32.totalorder %s30, 0
      %p182 = por %p180, %p181
      %p183 = scmp.ne.s32.totalorder %s171, %s172
      %p184 = scmp.eq.s32.totalorder %s31, 1
      %p185 = por %p183, %p184
      %p187 = scmp.ne.s32.totalorder %s172, %s186
      %p188 = scmp.eq.s32.totalorder %s31, 0
      %p189 = por %p187, %p188
      %s191 = sadd.s32 %s190, 1
      %p194 = scmp.eq.s32.totalorder %s25, 1
      %p195 = scmp.ne.s32.totalorder %s190, %s192
      %p196 = scmp.eq.s32.totalorder %s25, 0
      %p197 = por %p195, %p196
      %p198 = scmp.ne.s32.totalorder %s190, %s192
      %p199 = scmp.eq.s32.totalorder %s30, 1
      %p200 = por %p198, %p199
      %p201 = scmp.ne.s32.totalorder %s192, %s193
      %p202 = scmp.eq.s32.totalorder %s30, 0
      %p203 = por %p201, %p202
      %p204 = scmp.ne.s32.totalorder %s192, %s193
      %p205 = scmp.eq.s32.totalorder %s31, 1
      %p206 = por %p204, %p205
      %p208 = scmp.ne.s32.totalorder %s193, %s207
      %p209 = scmp.eq.s32.totalorder %s31, 0
      %p210 = por %p208, %p209
      %s212 = sadd.s32 %s211, 1
      %p215 = scmp.eq.s32.totalorder %s25, 1
      %p216 = scmp.ne.s32.totalorder %s211, %s213
      %p217 = scmp.eq.s32.totalorder %s25, 0
      %p218 = por %p216, %p217
      %p219 = scmp.ne.s32.totalorder %s211, %s213
      %p220 = scmp.eq.s32.totalorder %s30, 1
      %p221 = por %p219, %p220
      %p222 = scmp.ne.s32.totalorder %s213, %s214
      %p223 = scmp.eq.s32.totalorder %s30, 0
      %p224 = por %p222, %p223
      %p225 = scmp.ne.s32.totalorder %s213, %s214
      %p226 = scmp.eq.s32.totalorder %s31, 1
      %p227 = por %p225, %p226
      %p229 = scmp.ne.s32.totalorder %s214, %s228
      %p230 = scmp.eq.s32.totalorder %s31, 0
      %p231 = por %p229, %p230
      %s232 = ssub.s32 %s32, %s44
      %p233 = scmp.eq.s32.totalorder %s232, 0
      %s235 = sadd.s32 %s234, 1
      %s236 = scalar_select %p233, %s234, %s235
      %p239 = pneg %p233
      %p240 = scmp.eq.s32.totalorder %s25, 1
      %p241 = por %p239, %p240
      %p242 = scmp.ne.s32.totalorder %s234, %s237
      %p243 = scmp.eq.s32.totalorder %s25, 0
      %p244 = por %p242, %p243
      %p245 = scmp.ne.s32.totalorder %s234, %s237
      %p246 = scmp.eq.s32.totalorder %s30, 1
      %p247 = por %p245, %p246
      %p248 = scmp.ne.s32.totalorder %s237, %s238
      %p249 = scmp.eq.s32.totalorder %s30, 0
      %p250 = por %p248, %p249
      %p251 = scmp.ne.s32.totalorder %s237, %s238
      %p252 = scmp.eq.s32.totalorder %s31, 1
      %p253 = por %p251, %p252
      %p255 = scmp.ne.s32.totalorder %s238, %s254
      %p256 = scmp.eq.s32.totalorder %s31, 0
      %p257 = por %p255, %p256
      %p258 = scmp.le.s32.totalorder 1, %s25
      %p259 = scmp.lt.s32.totalorder %s25, 3
      %p260 = pnand %p258, %p259
      %p261 = pneg %p260
      // Predicated region
      $region9: #{tpu_custom_call.1} parent=5 // pred_check
        _
      $region10: #{tpu_custom_call.1} parent=5 // pred_check_branch
        %263 = sbr.rel (%p260) target = $region12
      $region11: #{tpu_custom_call.1} parent=5 // pred_region
        %s264 = ssub.s32 %s25, 1
        // Predicated region
        $region13: #{tpu_custom_call.1} parent=11 // pred_check
          %p265 = pneg %p140
        $region14: #{tpu_custom_call.1} parent=11 // pred_check_branch
          %267 = sbr.rel (%p265) target = $region16
        $region15: #{tpu_custom_call.1} parent=11 // pred_region
          %269 = vsyncadd [#allocation13], 0
          %s270 = sshll.u32 %s3, 4
          %s271 = int_to_ptr.hbm [resolvable:$true] %s270
          %s272 = sshll.u32 [#allocation12], 4
          %s273 = int_to_ptr.vmem [resolvable:$true] %s272
          %278 = dma.hbm_to_vmem [thread:$0]  %s271, 256, %s273, [#allocation13], 64, 64, 4
        $region16: #{tpu_custom_call.1} parent=11 // pred_fallthru
          _
        // Predicated region
        $region17: #{tpu_custom_call.1} parent=11 // pred_check
          %p279 = pneg %p161
        $region18: #{tpu_custom_call.1} parent=11 // pred_check_branch
          %281 = sbr.rel (%p279) target = $region20
        $region19: #{tpu_custom_call.1} parent=11 // pred_region
          %283 = vsyncadd [#allocation13], 0
          %s284 = sshll.u32 %s4, 4
          %s285 = int_to_ptr.hbm [resolvable:$true] %s284
          %s286 = sshll.u32 [#allocation14], 4
          %s287 = int_to_ptr.vmem [resolvable:$true] %s286
          %292 = dma.hbm_to_vmem [thread:$0]  %s285, 256, %s287, [#allocation13], 64, 64, 4
        $region20: #{tpu_custom_call.1} parent=11 // pred_fallthru
          _
        // Predicated region
        $region21: #{tpu_custom_call.1} parent=11 // pred_check
          %p293 = pneg %p182
        $region22: #{tpu_custom_call.1} parent=11 // pred_check_branch
          %295 = sbr.rel (%p293) target = $region24
        $region23: #{tpu_custom_call.1} parent=11 // pred_region
          %297 = vsyncadd [#allocation16], 0
          %s298 = sshll.u32 %s5, 4
          %s299 = int_to_ptr.hbm [resolvable:$true] %s298
          %s300 = sshll.u32 [#allocation15], 4
          %s301 = int_to_ptr.vmem [resolvable:$true] %s300
          %306 = dma.hbm_to_vmem [thread:$0]  %s299, 256, %s301, [#allocation16], 64, 64, 4
        $region24: #{tpu_custom_call.1} parent=11 // pred_fallthru
          _
        // Predicated region
        $region25: #{tpu_custom_call.1} parent=11 // pred_check
          %p307 = pneg %p203
        $region26: #{tpu_custom_call.1} parent=11 // pred_check_branch
          %309 = sbr.rel (%p307) target = $region28
        $region27: #{tpu_custom_call.1} parent=11 // pred_region
          %311 = vsyncadd [#allocation16], 0
          %s312 = sshll.u32 %s6, 4
          %s313 = int_to_ptr.hbm [resolvable:$true] %s312
          %s314 = sshll.u32 [#allocation17], 4
          %s315 = int_to_ptr.vmem [resolvable:$true] %s314
          %320 = dma.hbm_to_vmem [thread:$0]  %s313, 256, %s315, [#allocation16], 64, 64, 4
        $region28: #{tpu_custom_call.1} parent=11 // pred_fallthru
          _
        // Predicated region
        $region29: #{tpu_custom_call.1} parent=11 // pred_check
          %p321 = pneg %p224
        $region30: #{tpu_custom_call.1} parent=11 // pred_check_branch
          %323 = sbr.rel (%p321) target = $region32
        $region31: #{tpu_custom_call.1} parent=11 // pred_region
          _
        $region32: #{tpu_custom_call.1} parent=11 // pred_fallthru
          _
      $region12: #{tpu_custom_call.1} parent=5 // pred_fallthru
        _
      %p324 = scmp.lt.s32.totalorder %s25, 2
      // Predicated region
      $region33: #{tpu_custom_call.1} parent=5 // pred_check
        %p325 = pneg %p324
      $region34: #{tpu_custom_call.1} parent=5 // pred_check_branch
        %327 = sbr.rel (%p325) target = $region36
      $region35: #{tpu_custom_call.1} parent=5 // pred_region
        // Predicated region
        $region37: #{tpu_custom_call.1} parent=35 // pred_check
          %p328 = pneg %p57
        $region38: #{tpu_custom_call.1} parent=35 // pred_check_branch
          %330 = sbr.rel (%p328) target = $region40
        $region39: #{tpu_custom_call.1} parent=35 // pred_region
          %s331 = sand.u32 %s47, 1
          %s332 = scalar_lea.sflag [#allocation7], %s331
          %s333 = sand.u32 %s47, 1
          %s334 = smul.addr %s333, 8
          %s335 = scalar_lea.vmem [#allocation6], %s334
          %337 = vsyncadd %s332, 0
          %s338 = smul.addr %s32, 8
          %s339 = scalar_lea.hbm %s0, %s338
          %s341 = sshll.u32 %s339, 4
          %s342 = int_to_ptr.hbm [resolvable:$true] %s341
          %s343 = sshll.u32 %s335, 4
          %s344 = int_to_ptr.vmem [resolvable:$true] %s343
          %346 = dma.hbm_to_vmem [thread:$0]  %s342, 128, %s344, %s332
        $region40: #{tpu_custom_call.1} parent=35 // pred_fallthru
          _
        // Predicated region
        $region41: #{tpu_custom_call.1} parent=35 // pred_check
          %p347 = pneg %p85
        $region42: #{tpu_custom_call.1} parent=35 // pred_check_branch
          %349 = sbr.rel (%p347) target = $region44
        $region43: #{tpu_custom_call.1} parent=35 // pred_region
          %s350 = sand.u32 %s25, 1
          %s351 = scalar_lea.sflag [#allocation10], %s350
          %s352 = sand.u32 %s75, 1
          %s353 = smul.addr %s352, 8
          %s354 = scalar_lea.vmem [#allocation9], %s353
          %356 = vsyncadd %s351, 0
          %s357 = sadd.s32 %s33, %s32
          %s358 = smul.addr %s357, 8
          %s359 = scalar_lea.hbm %s1, %s358
          %s361 = sshll.u32 %s359, 4
          %s362 = int_to_ptr.hbm [resolvable:$true] %s361
          %s363 = sshll.u32 %s354, 4
          %s364 = int_to_ptr.vmem [resolvable:$true] %s363
          %366 = dma.hbm_to_vmem [thread:$0]  %s362, 128, %s364, %s351
        $region44: #{tpu_custom_call.1} parent=35 // pred_fallthru
          _
        // Predicated region
        $region45: #{tpu_custom_call.1} parent=35 // pred_check
          %p367 = pneg %p113
        $region46: #{tpu_custom_call.1} parent=35 // pred_check_branch
          %369 = sbr.rel (%p367) target = $region48
        $region47: #{tpu_custom_call.1} parent=35 // pred_region
          %s370 = sand.u32 %s25, 1
          %s371 = scalar_lea.sflag [#allocation10], %s370
          %s372 = sand.u32 %s103, 1
          %s373 = smul.addr %s372, 8
          %s374 = scalar_lea.vmem [#allocation11], %s373
          %376 = vsyncadd %s371, 0
          %s377 = sadd.s32 %s33, %s32
          %s378 = smul.addr %s377, 8
          %s379 = scalar_lea.hbm %s2, %s378
          %s381 = sshll.u32 %s379, 4
          %s382 = int_to_ptr.hbm [resolvable:$true] %s381
          %s383 = sshll.u32 %s374, 4
          %s384 = int_to_ptr.vmem [resolvable:$true] %s383
          %386 = dma.hbm_to_vmem [thread:$0]  %s382, 128, %s384, %s371
        $region48: #{tpu_custom_call.1} parent=35 // pred_fallthru
          _
      $region36: #{tpu_custom_call.1} parent=5 // pred_fallthru
        _
      %p387 = scmp.le.s32.totalorder 1, %s25
      %p388 = scmp.lt.s32.totalorder %s25, 3
      %p389 = pnand %p387, %p388
      %p390 = pneg %p389
      // Predicated region
      $region49: #{tpu_custom_call.1} parent=5 // pred_check
        _
      $region50: #{tpu_custom_call.1} parent=5 // pred_check_branch
        %392 = sbr.rel (%p389) target = $region52
      $region51: #{tpu_custom_call.1} parent=5 // pred_region
        %s393 = ssub.s32 %s25, 1
        %s394 = sand.u32 %s50, 1
        %s395 = scalar_lea.sflag [#allocation7], %s394
        %s396 = sand.u32 %s50, 1
        %s397 = smul.addr %s396, 8
        %s398 = scalar_lea.vmem [#allocation6], %s397
        // Predicated region
        $region53: #{tpu_custom_call.1} parent=51 // pred_check
          %p399 = pneg %p63
        $region54: #{tpu_custom_call.1} parent=51 // pred_check_branch
          %401 = sbr.rel (%p399) target = $region56
        $region55: #{tpu_custom_call.1} parent=51 // pred_region
          %403 = dma.done %s395, 128
        $region56: #{tpu_custom_call.1} parent=51 // pred_fallthru
          _
        %s404 = sand.u32 %s30, 1
        %s405 = scalar_lea.sflag [#allocation10], %s404
        %s406 = sand.u32 %s78, 1
        %s407 = smul.addr %s406, 8
        %s408 = scalar_lea.vmem [#allocation9], %s407
        // Predicated region
        $region57: #{tpu_custom_call.1} parent=51 // pred_check
          %p409 = pneg %p91
        $region58: #{tpu_custom_call.1} parent=51 // pred_check_branch
          %411 = sbr.rel (%p409) target = $region60
        $region59: #{tpu_custom_call.1} parent=51 // pred_region
          %413 = dma.done %s405, 128
        $region60: #{tpu_custom_call.1} parent=51 // pred_fallthru
          _
        %s414 = sand.u32 %s30, 1
        %s415 = scalar_lea.sflag [#allocation10], %s414
        %s416 = sand.u32 %s106, 1
        %s417 = smul.addr %s416, 8
        %s418 = scalar_lea.vmem [#allocation11], %s417
        // Predicated region
        $region61: #{tpu_custom_call.1} parent=51 // pred_check
          %p419 = pneg %p119
        $region62: #{tpu_custom_call.1} parent=51 // pred_check_branch
          %421 = sbr.rel (%p419) target = $region64
        $region63: #{tpu_custom_call.1} parent=51 // pred_region
          %423 = dma.done %s415, 128
        $region64: #{tpu_custom_call.1} parent=51 // pred_fallthru
          _
        // Predicated region
        $region65: #{tpu_custom_call.1} parent=51 // pred_check
          %p424 = pneg %p140
        $region66: #{tpu_custom_call.1} parent=51 // pred_check_branch
          %426 = sbr.rel (%p424) target = $region68
        $region67: #{tpu_custom_call.1} parent=51 // pred_region
          %428 = dma.done [#allocation13], 256
        $region68: #{tpu_custom_call.1} parent=51 // pred_fallthru
          _
        // Predicated region
        $region69: #{tpu_custom_call.1} parent=51 // pred_check
          %p429 = pneg %p161
        $region70: #{tpu_custom_call.1} parent=51 // pred_check_branch
          %431 = sbr.rel (%p429) target = $region72
        $region71: #{tpu_custom_call.1} parent=51 // pred_region
          %433 = dma.done [#allocation13], 256
        $region72: #{tpu_custom_call.1} parent=51 // pred_fallthru
          _
        // Predicated region
        $region73: #{tpu_custom_call.1} parent=51 // pred_check
          %p434 = pneg %p182
        $region74: #{tpu_custom_call.1} parent=51 // pred_check_branch
          %436 = sbr.rel (%p434) target = $region76
        $region75: #{tpu_custom_call.1} parent=51 // pred_region
          %438 = dma.done [#allocation16], 256
        $region76: #{tpu_custom_call.1} parent=51 // pred_fallthru
          _
        // Predicated region
        $region77: #{tpu_custom_call.1} parent=51 // pred_check
          %p439 = pneg %p203
        $region78: #{tpu_custom_call.1} parent=51 // pred_check_branch
          %441 = sbr.rel (%p439) target = $region80
        $region79: #{tpu_custom_call.1} parent=51 // pred_region
          %443 = dma.done [#allocation16], 256
        $region80: #{tpu_custom_call.1} parent=51 // pred_fallthru
          _
        %s444 = sand.u32 %s50, 1
        %s445 = scalar_lea.sflag [#allocation7], %s444
        %s446 = sand.u32 %s50, 1
        %s447 = smul.addr %s446, 8
        %s448 = scalar_lea.vmem [#allocation6], %s447
        %p449 = pneg %p63
        %p450 = pneg %p60
        %s451 = sand.u32 %s30, 1
        %s452 = scalar_lea.sflag [#allocation10], %s451
        %s453 = sand.u32 %s78, 1
        %s454 = smul.addr %s453, 8
        %s455 = scalar_lea.vmem [#allocation9], %s454
        %p456 = pneg %p91
        %p457 = pneg %p88
        %s458 = sand.u32 %s30, 1
        %s459 = scalar_lea.sflag [#allocation10], %s458
        %s460 = sand.u32 %s106, 1
        %s461 = smul.addr %s460, 8
        %s462 = scalar_lea.vmem [#allocation11], %s461
        %p463 = pneg %p119
        %p464 = pneg %p116
        %p465 = pneg %p140
        %p466 = pneg %p137
        %p467 = pneg %p161
        %p468 = pneg %p158
        %p469 = pneg %p182
        %p470 = pneg %p179
        %p471 = pneg %p203
        %p472 = pneg %p200
        %p473 = pneg %p224
        %p474 = pneg %p221
        %p475 = pneg %p250
        %p476 = pneg %p247
        %s477 = sand.u32 %s237, 1
        %s478 = scalar_lea.sflag [#allocation8], %s477
        %s479 = sand.u32 %s237, 1
        %s480 = smul.addr %s479, 8
        %s481 = scalar_lea.vmem [#allocation18], %s480
        %p483 = scmp.eq.s32.totalorder %s35, 0
        // Predicated region
        $region81: #{tpu_custom_call.1} parent=51 // pred_check
          %p484 = pneg %p483
        $region82: #{tpu_custom_call.1} parent=51 // pred_check_branch
          %486 = sbr.rel (%p484) target = $region84
        $region83: #{tpu_custom_call.1} parent=51 // pred_region
          %v487 = vld [vmem:[%s398] sm:$0xff]
          %v488 = vpack.c.bf16 %v487, %v487
          %v489 = vld [vmem:[#allocation12] sm:$0xf]
          %v490 = vld [vmem:[#allocation12 + $0x4] sm:$0xf]
          %v491 = vld [vmem:[#allocation12 + $0x8] sm:$0xf]
          %v492 = vld [vmem:[#allocation12 + $0xc] sm:$0xf]
          %v497 = vunpack.c.l.b16 %v489
          %v498 = vunpack.c.l.b16 %v490
          %v499 = vunpack.c.l.b16 %v491
          %v500 = vunpack.c.l.b16 %v492
          %v501 = vpack.c.b16 %v498, %v497
          %v502 = vpack.c.b16 %v500, %v499
          %vm505 = vcmask 261120
          %v507 = vsel %vm505, %v488, 0
          %509 = vmatpush.bf16.msra.mxu0 0
          %510 = vmatpush.bf16.msra.mxu0 0
          %511 = vmatpush.bf16.msra.mxu0 0
          %512 = vmatpush.bf16.msra.mxu0 0
          %513 = vmatpush.bf16.msra.mxu0 0
          %514 = vmatpush.bf16.msra.mxu0 0
          %515 = vmatpush.bf16.msra.mxu0 %v502
          %516 = vmatpush.bf16.msra.mxu0 %v501
          %517 = vmatmul.bf16.gmra.mxu0 %v507
          %v518 = vpop.f32.mrf.mxu0
          %v519 = vadd.f32 0.0, %v518
          %v520 = vpop.f32.mrf.mxu0
          %521 = vdwg.mxu0
          %v522 = vpack.c.bf16 %v519, %v519
          %vm523 = vcmask 257024
          %524 = vst.msk [vmem:[#allocation2] sm:$0xf] %vm523, %v522
          %vm525 = vcmask 7168
          %526 = vst.msk [vmem:[#allocation3] sm:$0xff] %vm525, -inf
          %527 = vst.msk [vmem:[#allocation3 + $0x8] sm:$0xff] %vm525, -inf
          %528 = vst.msk [vmem:[#allocation3 + $0x10] sm:$0xff] %vm525, -inf
          %529 = vst.msk [vmem:[#allocation3 + $0x18] sm:$0xff] %vm525, -inf
          %530 = vst.msk [vmem:[#allocation4] sm:$0xff] %vm525, 0.0
          %531 = vst.msk [vmem:[#allocation4 + $0x8] sm:$0xff] %vm525, 0.0
          %532 = vst.msk [vmem:[#allocation4 + $0x10] sm:$0xff] %vm525, 0.0
          %533 = vst.msk [vmem:[#allocation4 + $0x18] sm:$0xff] %vm525, 0.0
          %534 = vst.msk [vmem:[#allocation5] sm:$0xff] %vm505, 0.0
        $region84: #{tpu_custom_call.1} parent=51 // pred_fallthru
          _
        %v535 = vld [vmem:[%s408] sm:$0xff]
        %v536 = vpack.c.bf16 %v535, %v535
        %v537 = vld [vmem:[%s418] sm:$0xff]
        %v538 = vpack.c.bf16 %v537, %v537
        %v539 = vld [vmem:[#allocation14] sm:$0xf]
        %v540 = vld [vmem:[#allocation14 + $0x4] sm:$0xf]
        %v541 = vld [vmem:[#allocation14 + $0x8] sm:$0xf]
        %v542 = vld [vmem:[#allocation14 + $0xc] sm:$0xf]
        %v547 = vunpack.c.l.b16 %v539
        %v548 = vunpack.c.l.b16 %v540
        %v549 = vunpack.c.l.b16 %v541
        %v550 = vunpack.c.l.b16 %v542
        %v551 = vpack.c.b16 %v548, %v547
        %v552 = vpack.c.b16 %v550, %v549
        %vm555 = vcmask 261120
        %v557 = vsel %vm555, %v536, 0
        %559 = vmatpush.bf16.msra.mxu0 0
        %560 = vmatpush.bf16.msra.mxu0 0
        %561 = vmatpush.bf16.msra.mxu0 0
        %562 = vmatpush.bf16.msra.mxu0 0
        %563 = vmatpush.bf16.msra.mxu0 0
        %564 = vmatpush.bf16.msra.mxu0 0
        %565 = vmatpush.bf16.msra.mxu0 %v552
        %566 = vmatpush.bf16.msra.mxu0 %v551
        %567 = vmatmul.bf16.gmra.mxu0 %v557
        %v568 = vpop.f32.mrf.mxu0
        %v569 = vadd.f32 0.0, %v568
        %v570 = vpop.f32.mrf.mxu0
        %571 = vdwg.mxu0
        %v572 = vpack.c.bf16 %v569, %v569
        %v573 = vld [vmem:[#allocation15] sm:$0xf]
        %v574 = vld [vmem:[#allocation15 + $0x4] sm:$0xf]
        %v575 = vld [vmem:[#allocation15 + $0x8] sm:$0xf]
        %v576 = vld [vmem:[#allocation15 + $0xc] sm:$0xf]
        %v581 = vunpack.c.l.b16 %v573
        %v582 = vunpack.c.l.b16 %v574
        %v583 = vunpack.c.l.b16 %v575
        %v584 = vunpack.c.l.b16 %v576
        %v585 = vpack.c.b16 %v582, %v581
        %v586 = vpack.c.b16 %v584, %v583
        %v590 = vsel %vm555, %v538, 0
        %592 = vmatpush.bf16.msra.mxu0 0
        %593 = vmatpush.bf16.msra.mxu0 0
        %594 = vmatpush.bf16.msra.mxu0 0
        %595 = vmatpush.bf16.msra.mxu0 0
        %596 = vmatpush.bf16.msra.mxu0 0
        %597 = vmatpush.bf16.msra.mxu0 0
        %598 = vmatpush.bf16.msra.mxu0 %v586
        %599 = vmatpush.bf16.msra.mxu0 %v585
        %600 = vmatmul.bf16.gmra.mxu0 %v590
        %v601 = vpop.f32.mrf.mxu0
        %v602 = vadd.f32 0.0, %v601
        %v603 = vpop.f32.mrf.mxu0
        %604 = vdwg.mxu0
        %v605 = vpack.c.bf16 %v602, %v602
        %v606 = vld [vmem:[#allocation2] sm:$0xf]
        %vm607 = vcmask 64512
        %v609 = vsel %vm607, %v606, 0
        %v612 = vsel %vm607, %v572, 0
        %614 = vmatpush.bf16.xpose.msra.mxu0 0
        %615 = vmatpush.bf16.xpose.msra.mxu0 0
        %616 = vmatpush.bf16.xpose.msra.mxu0 0
        %617 = vmatpush.bf16.xpose.msra.mxu0 0
        %618 = vmatpush.bf16.xpose.msra.mxu0 0
        %619 = vmatpush.bf16.xpose.msra.mxu0 0
        %620 = vmatpush.bf16.xpose.msra.mxu0 0
        %621 = vmatpush.bf16.xpose.msra.mxu0 %v612
        %622 = vmatmul.bf16.gmra.mxu0 %v609
        %v623 = vpop.f32.mrf.mxu0
        %v624 = vadd.f32 0.0, %v623
        %v625 = vpop.f32.mrf.mxu0
        %626 = vdwg.mxu0
        %v627 = vld [vmem:[#allocation3] sm:$0xff]
        %v628 = vsel %vm607, %v624, -inf
        %629 = vmax.xlane.f32.xlu0 %v628
        %v630 = vpop.xlane.xlu0 %629
        %v631 = vmax.f32 %v627, %v630
        %v632 = vsub.f32 %v627, %v631
        %v633 = vmul.f32 %v632, 1.442695
        %v634 = vpow.pop %v633
        %636 = vset.pattern.permute.xlu0 0
        %637 = vperm.xlu0 %636, %v631
        %v638 = vpop.permute.xlu0 %637
        %v640 = vsub.f32 %v624, %v638
        %v641 = vmul.f32 %v640, 1.442695
        %v642 = vpow.pop %v641
        %v643 = vld [vmem:[#allocation4] sm:$0xff]
        %v644 = vmul.f32 %v634, %v643
        %v645 = vsel %vm607, %v642, 0.0
        %646 = vadd.xlane.f32.xlu0 %v645
        %v647 = vpop.xlane.xlu0 %646
        %v648 = vadd.f32 %v644, %v647
        %vm649 = vcmask 7168
        %650 = vst.msk [vmem:[#allocation4] sm:$0xff] %vm649, %v648
        %v651 = vpack.c.bf16 %v642, %v642
        %v653 = vsel %vm607, %v651, 0
        %vm655 = vcmask 1043456
        %v657 = vsel %vm655, %v605, 0
        %659 = vmatpush.bf16.msra.mxu0 0
        %660 = vmatpush.bf16.msra.mxu0 0
        %661 = vmatpush.bf16.msra.mxu0 0
        %662 = vmatpush.bf16.msra.mxu0 0
        %663 = vmatpush.bf16.msra.mxu0 0
        %664 = vmatpush.bf16.msra.mxu0 0
        %665 = vmatpush.bf16.msra.mxu0 0
        %666 = vmatpush.bf16.msra.mxu0 %v657
        %667 = vmatmul.bf16.gmra.mxu0 %v653
        %v668 = vpop.f32.mrf.mxu0
        %v669 = vadd.f32 0.0, %v668
        %v670 = vpop.f32.mrf.mxu0
        %671 = vdwg.mxu0
        %v672 = vld [vmem:[#allocation5] sm:$0xff]
        %674 = vset.pattern.permute.xlu0 0
        %675 = vperm.xlu0 %674, %v634
        %v676 = vpop.permute.xlu0 %675
        %v678 = vmul.f32 %v676, %v672
        %v679 = vadd.f32 %v678, %v669
        %680 = vst.msk [vmem:[#allocation5] sm:$0xff] %vm607, %v679
        %681 = vst.msk [vmem:[#allocation3] sm:$0xff] %vm649, %v631
        %v683 = vunpack.c.l.b16 %v606
        %v684 = vpack.c.b16 %v683, %v683
        %685 = vrot.lane.b32.xlu0 %v684, 120
        %v686 = vpop.permute.xlu0 %685
        %v688 = vunpack.c.l.b16 %v572
        %v689 = vpack.c.b16 %v688, %v688
        %690 = vrot.lane.b32.xlu0 %v689, 120
        %v691 = vpop.permute.xlu0 %690
        %v693 = vsel %vm607, %v686, 0
        %v696 = vsel %vm607, %v691, 0
        %698 = vmatpush.bf16.xpose.msra.mxu0 0
        %699 = vmatpush.bf16.xpose.msra.mxu0 0
        %700 = vmatpush.bf16.xpose.msra.mxu0 0
        %701 = vmatpush.bf16.xpose.msra.mxu0 0
        %702 = vmatpush.bf16.xpose.msra.mxu0 0
        %703 = vmatpush.bf16.xpose.msra.mxu0 0
        %704 = vmatpush.bf16.xpose.msra.mxu0 0
        %705 = vmatpush.bf16.xpose.msra.mxu0 %v696
        %706 = vmatmul.bf16.gmra.mxu0 %v693
        %v707 = vpop.f32.mrf.mxu0
        %v708 = vadd.f32 0.0, %v707
        %v709 = vpop.f32.mrf.mxu0
        %710 = vdwg.mxu0
        %s711 = scalar_lea.vmem [#allocation3], 8
        %v712 = vld [vmem:[%s711] sm:$0xff]
        %v713 = vsel %vm607, %v708, -inf
        %714 = vmax.xlane.f32.xlu0 %v713
        %v715 = vpop.xlane.xlu0 %714
        %v716 = vmax.f32 %v712, %v715
        %v717 = vsub.f32 %v712, %v716
        %v718 = vmul.f32 %v717, 1.442695
        %v719 = vpow.pop %v718
        %721 = vset.pattern.permute.xlu0 0
        %722 = vperm.xlu0 %721, %v716
        %v723 = vpop.permute.xlu0 %722
        %v725 = vsub.f32 %v708, %v723
        %v726 = vmul.f32 %v725, 1.442695
        %v727 = vpow.pop %v726
        %s728 = scalar_lea.vmem [#allocation4], 8
        %v729 = vld [vmem:[%s728] sm:$0xff]
        %v730 = vmul.f32 %v719, %v729
        %v731 = vsel %vm607, %v727, 0.0
        %732 = vadd.xlane.f32.xlu0 %v731
        %v733 = vpop.xlane.xlu0 %732
        %v734 = vadd.f32 %v730, %v733
        %735 = vst.msk [vmem:[%s728] sm:$0xff] %vm649, %v734
        %v736 = vpack.c.bf16 %v727, %v727
        %v738 = vunpack.c.l.b16 %v605
        %v739 = vpack.c.b16 %v738, %v738
        %740 = vrot.lane.b32.xlu0 %v739, 120
        %v741 = vpop.permute.xlu0 %740
        %v743 = vsel %vm607, %v736, 0
        %v746 = vsel %vm655, %v741, 0
        %748 = vmatpush.bf16.msra.mxu0 0
        %749 = vmatpush.bf16.msra.mxu0 0
        %750 = vmatpush.bf16.msra.mxu0 0
        %751 = vmatpush.bf16.msra.mxu0 0
        %752 = vmatpush.bf16.msra.mxu0 0
        %753 = vmatpush.bf16.msra.mxu0 0
        %754 = vmatpush.bf16.msra.mxu0 0
        %755 = vmatpush.bf16.msra.mxu0 %v746
        %756 = vmatmul.bf16.gmra.mxu0 %v743
        %v757 = vpop.f32.mrf.mxu0
        %v758 = vadd.f32 0.0, %v757
        %v759 = vpop.f32.mrf.mxu0
        %760 = vdwg.mxu0
        %v761 = vld [vmem:[#allocation5] sm:$0xff]
        %763 = vset.pattern.permute.xlu0 0
        %764 = vperm.xlu0 %763, %v719
        %v765 = vpop.permute.xlu0 %764
        %v767 = vmul.f32 %v765, %v761
        %769 = vrot.lane.b32.xlu0 %v758, 8
        %v770 = vpop.permute.xlu0 %769
        %v772 = vadd.f32 %v767, %v770
        %vm773 = vcmask 130112
        %774 = vst.msk [vmem:[#allocation5] sm:$0xff] %vm773, %v772
        %775 = vst.msk [vmem:[%s711] sm:$0xff] %vm649, %v716
        %776 = vrot.lane.b32.xlu0 %v684, 112
        %v777 = vpop.permute.xlu0 %776
        %778 = vrot.lane.b32.xlu0 %v689, 112
        %v779 = vpop.permute.xlu0 %778
        %v781 = vsel %vm607, %v777, 0
        %v784 = vsel %vm607, %v779, 0
        %786 = vmatpush.bf16.xpose.msra.mxu0 0
        %787 = vmatpush.bf16.xpose.msra.mxu0 0
        %788 = vmatpush.bf16.xpose.msra.mxu0 0
        %789 = vmatpush.bf16.xpose.msra.mxu0 0
        %790 = vmatpush.bf16.xpose.msra.mxu0 0
        %791 = vmatpush.bf16.xpose.msra.mxu0 0
        %792 = vmatpush.bf16.xpose.msra.mxu0 0
        %793 = vmatpush.bf16.xpose.msra.mxu0 %v784
        %794 = vmatmul.bf16.gmra.mxu0 %v781
        %v795 = vpop.f32.mrf.mxu0
        %v796 = vadd.f32 0.0, %v795
        %v797 = vpop.f32.mrf.mxu0
        %798 = vdwg.mxu0
        %s799 = scalar_lea.vmem [#allocation3], 16
        %v800 = vld [vmem:[%s799] sm:$0xff]
        %v801 = vsel %vm607, %v796, -inf
        %802 = vmax.xlane.f32.xlu0 %v801
        %v803 = vpop.xlane.xlu0 %802
        %v804 = vmax.f32 %v800, %v803
        %v805 = vsub.f32 %v800, %v804
        %v806 = vmul.f32 %v805, 1.442695
        %v807 = vpow.pop %v806
        %809 = vset.pattern.permute.xlu0 0
        %810 = vperm.xlu0 %809, %v804
        %v811 = vpop.permute.xlu0 %810
        %v813 = vsub.f32 %v796, %v811
        %v814 = vmul.f32 %v813, 1.442695
        %v815 = vpow.pop %v814
        %s816 = scalar_lea.vmem [#allocation4], 16
        %v817 = vld [vmem:[%s816] sm:$0xff]
        %v818 = vmul.f32 %v807, %v817
        %v819 = vsel %vm607, %v815, 0.0
        %820 = vadd.xlane.f32.xlu0 %v819
        %v821 = vpop.xlane.xlu0 %820
        %v822 = vadd.f32 %v818, %v821
        %823 = vst.msk [vmem:[%s816] sm:$0xff] %vm649, %v822
        %v824 = vpack.c.bf16 %v815, %v815
        %825 = vrot.lane.b32.xlu0 %v739, 112
        %v826 = vpop.permute.xlu0 %825
        %v828 = vsel %vm607, %v824, 0
        %v831 = vsel %vm655, %v826, 0
        %833 = vmatpush.bf16.msra.mxu0 0
        %834 = vmatpush.bf16.msra.mxu0 0
        %835 = vmatpush.bf16.msra.mxu0 0
        %836 = vmatpush.bf16.msra.mxu0 0
        %837 = vmatpush.bf16.msra.mxu0 0
        %838 = vmatpush.bf16.msra.mxu0 0
        %839 = vmatpush.bf16.msra.mxu0 0
        %840 = vmatpush.bf16.msra.mxu0 %v831
        %841 = vmatmul.bf16.gmra.mxu0 %v828
        %v842 = vpop.f32.mrf.mxu0
        %v843 = vadd.f32 0.0, %v842
        %v844 = vpop.f32.mrf.mxu0
        %845 = vdwg.mxu0
        %v846 = vld [vmem:[#allocation5] sm:$0xff]
        %848 = vset.pattern.permute.xlu0 0
        %849 = vperm.xlu0 %848, %v807
        %v850 = vpop.permute.xlu0 %849
        %v852 = vmul.f32 %v850, %v846
        %854 = vrot.lane.b32.xlu0 %v843, 16
        %v855 = vpop.permute.xlu0 %854
        %v857 = vadd.f32 %v852, %v855
        %vm858 = vcmask 195712
        %859 = vst.msk [vmem:[#allocation5] sm:$0xff] %vm858, %v857
        %860 = vst.msk [vmem:[%s799] sm:$0xff] %vm649, %v804
        %861 = vrot.lane.b32.xlu0 %v684, 104
        %v862 = vpop.permute.xlu0 %861
        %863 = vrot.lane.b32.xlu0 %v689, 104
        %v864 = vpop.permute.xlu0 %863
        %v866 = vsel %vm607, %v862, 0
        %v869 = vsel %vm607, %v864, 0
        %871 = vmatpush.bf16.xpose.msra.mxu0 0
        %872 = vmatpush.bf16.xpose.msra.mxu0 0
        %873 = vmatpush.bf16.xpose.msra.mxu0 0
        %874 = vmatpush.bf16.xpose.msra.mxu0 0
        %875 = vmatpush.bf16.xpose.msra.mxu0 0
        %876 = vmatpush.bf16.xpose.msra.mxu0 0
        %877 = vmatpush.bf16.xpose.msra.mxu0 0
        %878 = vmatpush.bf16.xpose.msra.mxu0 %v869
        %879 = vmatmul.bf16.gmra.mxu0 %v866
        %v880 = vpop.f32.mrf.mxu0
        %v881 = vadd.f32 0.0, %v880
        %v882 = vpop.f32.mrf.mxu0
        %883 = vdwg.mxu0
        %s884 = scalar_lea.vmem [#allocation3], 24
        %v885 = vld [vmem:[%s884] sm:$0xff]
        %v886 = vsel %vm607, %v881, -inf
        %887 = vmax.xlane.f32.xlu0 %v886
        %v888 = vpop.xlane.xlu0 %887
        %v889 = vmax.f32 %v885, %v888
        %v890 = vsub.f32 %v885, %v889
        %v891 = vmul.f32 %v890, 1.442695
        %v892 = vpow.pop %v891
        %894 = vset.pattern.permute.xlu0 0
        %895 = vperm.xlu0 %894, %v889
        %v896 = vpop.permute.xlu0 %895
        %v898 = vsub.f32 %v881, %v896
        %v899 = vmul.f32 %v898, 1.442695
        %v900 = vpow.pop %v899
        %s901 = scalar_lea.vmem [#allocation4], 24
        %v902 = vld [vmem:[%s901] sm:$0xff]
        %v903 = vmul.f32 %v892, %v902
        %v904 = vsel %vm607, %v900, 0.0
        %905 = vadd.xlane.f32.xlu0 %v904
        %v906 = vpop.xlane.xlu0 %905
        %v907 = vadd.f32 %v903, %v906
        %908 = vst.msk [vmem:[%s901] sm:$0xff] %vm649, %v907
        %v909 = vpack.c.bf16 %v900, %v900
        %910 = vrot.lane.b32.xlu0 %v739, 104
        %v911 = vpop.permute.xlu0 %910
        %v913 = vsel %vm607, %v909, 0
        %v916 = vsel %vm655, %v911, 0
        %918 = vmatpush.bf16.msra.mxu0 0
        %919 = vmatpush.bf16.msra.mxu0 0
        %920 = vmatpush.bf16.msra.mxu0 0
        %921 = vmatpush.bf16.msra.mxu0 0
        %922 = vmatpush.bf16.msra.mxu0 0
        %923 = vmatpush.bf16.msra.mxu0 0
        %924 = vmatpush.bf16.msra.mxu0 0
        %925 = vmatpush.bf16.msra.mxu0 %v916
        %926 = vmatmul.bf16.gmra.mxu0 %v913
        %v927 = vpop.f32.mrf.mxu0
        %v928 = vadd.f32 0.0, %v927
        %v929 = vpop.f32.mrf.mxu0
        %930 = vdwg.mxu0
        %v931 = vld [vmem:[#allocation5] sm:$0xff]
        %933 = vset.pattern.permute.xlu0 0
        %934 = vperm.xlu0 %933, %v892
        %v935 = vpop.permute.xlu0 %934
        %v937 = vmul.f32 %v935, %v931
        %939 = vrot.lane.b32.xlu0 %v928, 24
        %v940 = vpop.permute.xlu0 %939
        %v942 = vadd.f32 %v937, %v940
        %vm943 = vcmask 261312
        %944 = vst.msk [vmem:[#allocation5] sm:$0xff] %vm943, %v942
        %945 = vst.msk [vmem:[%s884] sm:$0xff] %vm649, %v889
        // Predicated region
        $region85: #{tpu_custom_call.1} parent=51 // pred_check
          %p946 = pneg %p483
        $region86: #{tpu_custom_call.1} parent=51 // pred_check_branch
          %948 = sbr.rel (%p946) target = $region88
        $region87: #{tpu_custom_call.1} parent=51 // pred_region
          %v949 = vld [vmem:[#allocation4] sm:$0xff]
          %v950 = vrcp.pop %v949
          %v951 = vld [vmem:[#allocation5] sm:$0xff]
          %953 = vset.pattern.permute.xlu0 0
          %954 = vperm.xlu0 %953, %v950
          %v955 = vpop.permute.xlu0 %954
          %v957 = vmul.f32 %v951, %v955
          %958 = vst.msk [vmem:[#allocation5] sm:$0xff] %vm607, %v957
          %v959 = vld [vmem:[%s728] sm:$0xff]
          %v960 = vrcp.pop %v959
          %v961 = vld [vmem:[#allocation5] sm:$0xff]
          %963 = vset.pattern.permute.xlu0 0
          %964 = vperm.xlu0 %963, %v960
          %v965 = vpop.permute.xlu0 %964
          %v967 = vmul.f32 %v961, %v965
          %968 = vst.msk [vmem:[#allocation5] sm:$0xff] %vm773, %v967
          %v969 = vld [vmem:[%s816] sm:$0xff]
          %v970 = vrcp.pop %v969
          %v971 = vld [vmem:[#allocation5] sm:$0xff]
          %973 = vset.pattern.permute.xlu0 0
          %974 = vperm.xlu0 %973, %v970
          %v975 = vpop.permute.xlu0 %974
          %v977 = vmul.f32 %v971, %v975
          %978 = vst.msk [vmem:[#allocation5] sm:$0xff] %vm858, %v977
          %v979 = vld [vmem:[%s901] sm:$0xff]
          %v980 = vrcp.pop %v979
          %v981 = vld [vmem:[#allocation5] sm:$0xff]
          %983 = vset.pattern.permute.xlu0 0
          %984 = vperm.xlu0 %983, %v980
          %v985 = vpop.permute.xlu0 %984
          %v987 = vmul.f32 %v981, %v985
          %988 = vst.msk [vmem:[#allocation5] sm:$0xff] %vm943, %v987
          %v989 = vld [vmem:[#allocation5] sm:$0xff]
          %v990 = vpack.c.bf16 %v989, %v989
          %v991 = vld [vmem:[#allocation17] sm:$0xf]
          %v992 = vld [vmem:[#allocation17 + $0x4] sm:$0xf]
          %v993 = vld [vmem:[#allocation17 + $0x8] sm:$0xf]
          %v994 = vld [vmem:[#allocation17 + $0xc] sm:$0xf]
          %v995 = vld [vmem:[%s7] sm:$0x1]
          %v997 = vperm.slane %v995, 0
          %v1003 = vunpack.c.l.b16 %v991
          %v1004 = vunpack.c.l.b16 %v992
          %v1005 = vunpack.c.l.b16 %v993
          %v1006 = vunpack.c.l.b16 %v994
          %v1007 = vpack.c.b16 %v1004, %v1003
          %v1008 = vpack.c.b16 %v1006, %v1005
          %v1012 = vsel %vm555, %v990, 0
          %1014 = vmatpush.bf16.msra.mxu0 0
          %1015 = vmatpush.bf16.msra.mxu0 0
          %1016 = vmatpush.bf16.msra.mxu0 0
          %1017 = vmatpush.bf16.msra.mxu0 0
          %1018 = vmatpush.bf16.msra.mxu0 0
          %1019 = vmatpush.bf16.msra.mxu0 0
          %1020 = vmatpush.bf16.msra.mxu0 %v1008
          %1021 = vmatpush.bf16.msra.mxu0 %v1007
          %1022 = vmatmul.bf16.gmra.mxu0 %v1012
          %v1023 = vpop.f32.mrf.mxu0
          %v1024 = vadd.f32 %v997, %v1023
          %v1025 = vpop.f32.mrf.mxu0
          %1026 = vdwg.mxu0
          %1027 = vst.msk [vmem:[%s481] sm:$0xff] %vm555, %v1024
        $region88: #{tpu_custom_call.1} parent=51 // pred_fallthru
          _
        %s1028 = sand.u32 %s237, 1
        %s1029 = scalar_lea.sflag [#allocation8], %s1028
        %s1030 = sand.u32 %s237, 1
        %s1031 = smul.addr %s1030, 8
        %s1032 = scalar_lea.vmem [#allocation18], %s1031
        // Predicated region
        $region89: #{tpu_custom_call.1} parent=51 // pred_check
          %p1033 = pneg %p247
        $region90: #{tpu_custom_call.1} parent=51 // pred_check_branch
          %1035 = sbr.rel (%p1033) target = $region92
        $region91: #{tpu_custom_call.1} parent=51 // pred_region
          %1037 = vsyncadd %s1029, 0
          %s1038 = smul.addr %s34, 8
          %s1039 = scalar_lea.hbm %s8, %s1038
          %s1041 = sshll.u32 %s1032, 4
          %s1042 = int_to_ptr.vmem [resolvable:$true] %s1041
          %s1043 = sshll.u32 %s1039, 4
          %s1044 = int_to_ptr.hbm [resolvable:$true] %s1043
          %1046 = dma.vmem_to_hbm [thread:$0]  %s1042, 128, %s1044, %s1029
        $region92: #{tpu_custom_call.1} parent=51 // pred_fallthru
          _
      $region52: #{tpu_custom_call.1} parent=5 // pred_fallthru
        _
      %p1047 = scmp.le.s32.totalorder 2, %s25
      // Predicated region
      $region93: #{tpu_custom_call.1} parent=5 // pred_check
        %p1048 = pneg %p1047
      $region94: #{tpu_custom_call.1} parent=5 // pred_check_branch
        %1050 = sbr.rel (%p1048) target = $region96
      $region95: #{tpu_custom_call.1} parent=5 // pred_region
        %s1051 = ssub.s32 %s25, 2
        // Predicated region
        $region97: #{tpu_custom_call.1} parent=95 // pred_check
          %p1052 = pneg %p253
        $region98: #{tpu_custom_call.1} parent=95 // pred_check_branch
          %1054 = sbr.rel (%p1052) target = $region100
        $region99: #{tpu_custom_call.1} parent=95 // pred_region
          %s1055 = sand.u32 %s238, 1
          %s1056 = scalar_lea.sflag [#allocation8], %s1055
          %s1057 = sand.u32 %s238, 1
          %s1058 = smul.addr %s1057, 8
          %s1059 = scalar_lea.vmem [#allocation18], %s1058
          %1061 = dma.done %s1056, 128
        $region100: #{tpu_custom_call.1} parent=95 // pred_fallthru
          _
      $region96: #{tpu_custom_call.1} parent=5 // pred_fallthru
        _
    $region6: #{tpu_custom_call.1} parent=1 // loop_footer
      %s29 = sadd.s32 1, %s25
    $region7: #{tpu_custom_call.1} parent=1 // loop_footer_branch
      %24 = sbr.rel target = $region3
    $region8: #{tpu_custom_call.1} parent=1 // loop_exit
      _
    %1062 = vsyncpa [#allocation7], 1
    %s1063 = scalar_lea.sflag [#allocation7], 1
    %1064 = vsyncpa %s1063, 1
    %1065 = vsyncpa [#allocation10], 1
    %s1066 = scalar_lea.sflag [#allocation10], 1
    %1067 = vsyncpa %s1066, 1
    %1068 = vsyncpa [#allocation13], 1
    %1069 = vsyncpa [#allocation16], 1
    %1070 = vsyncpa [#allocation8], 1
    %s1071 = scalar_lea.sflag [#allocation8], 1
    %1072 = vsyncpa %s1071, 1

</llo_original>
